<compile_context>
chip_gen: v6e
topology: v6e:2x2x1
jax: 0.10.0
libtpu: 0.0.40
codegen_flags: <defaults>
</compile_context>

<pallas_src>
import functools

import jax
import jax.numpy as jnp
import numpy as np
from jax.experimental import pallas as pl
from jax.experimental.pallas import tpu as pltpu

BN_EPS = 1e-5
LANES = 128                      # padded channel width -> lane-dense loads/stores
_TAP_ORDER = (4, 0, 1, 2, 3, 5, 6, 7, 8)   # center tap first (shortcut = x1[:, :Cin])


# ----------------------------------------------------------------------------
# Pallas kernel: one full residual block per batch element
# ----------------------------------------------------------------------------
def _block_kernel(x1_ref, w1_ref, b1_ref, w2_ref, b2_ref, ws_ref, o_ref,
                  pad_ref, *, h, w, cin):
    """Fused ResNet block.

    x1_ref : (1, HW, 9*Cin)  im2col of x for conv1 (center tap first; stride &
                             padding already applied outside), bf16
    w1_ref : (9*Cin, Cp)     conv1 weight with BN1 scale folded, Cout padded
    b1_ref : (1, Cp)         folded BN1 bias
    w2_ref : (9*Cp, Cp)      conv2 weight with BN2 scale folded (padded in/out)
    b2_ref : (1, Cp)         folded BN2 bias + folded shortcut bias (pre-summed)
    ws_ref : (Cin, Cp)       projection weight / identity / zeros
    o_ref  : (1, HW, Cp)     block output (padded channels)
    pad_ref: (h+2, w+2, Cp)  VMEM scratch: zero-padded conv1 activation (halo=1)
    """
    cp = o_ref.shape[-1]
    hw = h * w

    x1 = x1_ref[0]                                               # (hw, 9*cin) bf16

    # conv1 (+ folded BN1 scale) as ONE MXU matmul over K = 9*Cin, bias + ReLU.
    h1 = jnp.dot(x1, w1_ref[...], preferred_element_type=jnp.float32)
    h1 = jnp.maximum(h1 + b1_ref[...], 0.0)                      # (hw, cp) f32

    # Build conv2's 3x3 halo entirely in VMEM (never touches HBM).
    pad_ref[...] = jnp.zeros_like(pad_ref)
    pad_ref[1:h + 1, 1:w + 1, :] = h1.reshape(h, w, cp)

    # In-VMEM im2col: 9 shifted windows concatenated on the (aligned) lane
    # axis, then ONE matmul with K = 9*Cp.
    taps = []
    for kh in range(3):
        for kw in range(3):
            taps.append(pad_ref[kh:kh + h, kw:kw + w, :].reshape(hw, cp))
    x2 = jnp.concatenate(taps, axis=-1).astype(jnp.bfloat16)     # (hw, 9*cp)

    h2 = jnp.dot(x2, w2_ref[...], preferred_element_type=jnp.float32)

    # Shortcut (projection / identity / disabled) reuses the CENTER im2col tap
    # of conv1, which is exactly the 1x1-stride-s subsampled input -- no
    # separate HBM input stream for it.
    sc = jnp.dot(x1[:, :cin], ws_ref[...], preferred_element_type=jnp.float32)

    o_ref[0] = jnp.maximum(h2 + sc + b2_ref[...], 0.0).astype(o_ref.dtype)


# ----------------------------------------------------------------------------
# JAX glue: im2col (stride/pad, center-tap-first), BN folding, lane padding
# ----------------------------------------------------------------------------
def _im2col_center_first(x_nhwc, stride):
    """(N, H, W, C) -> (N, Ho*Wo, 9*C) with tap order given by _TAP_ORDER."""
    n, h, w, c = x_nhwc.shape
    xp = jnp.pad(x_nhwc, ((0, 0), (1, 1), (1, 1), (0, 0)))
    ho = (h + 2 - 3) // stride + 1
    wo = (w + 2 - 3) // stride + 1
    taps = []
    for kh in range(3):
        for kw in range(3):
            taps.append(xp[:, kh:kh + stride * ho:stride,
                           kw:kw + stride * wo:stride, :])
    taps = [taps[t] for t in _TAP_ORDER]
    cols = jnp.concatenate(taps, axis=-1)                 # (N, Ho, Wo, 9*C)
    return cols.reshape(n, ho * wo, 9 * c), ho, wo


def _bn_fold(bn):
    gamma, beta, mean, var = bn
    scale = gamma / jnp.sqrt(var + BN_EPS)
    return scale, beta - mean * scale


def _pad_lanes(m, cp):
    return jnp.zeros((m.shape[0], cp), m.dtype).at[:, :m.shape[1]].set(m)


def _pad_bias(b, cp):
    return jnp.zeros((1, cp), jnp.float32).at[0, :b.shape[0]].set(b)


# ----------------------------------------------------------------------------
# Block forward (wrapper around the fused kernel)
# ----------------------------------------------------------------------------
def block_forward(x_nchw, p, *, lanes=LANES):
    """Forward pass of one Block. x is NCHW (PyTorch layout); returns NCHW."""
    n, f_in, _, _ = x_nchw.shape
    f_out = p["w1"].shape[-1]
    stride = 2 if p["downsample"] else 1
    cp = lanes

    x = jnp.transpose(x_nchw, (0, 2, 3, 1))               # NHWC
    x1, ho, wo = _im2col_center_first(x, stride)          # (N, HW, 9*f_in)
    hw = ho * wo

    # Main-path weights with inference BatchNorm scale folded in; conv1 weight
    # rows are permuted to the same center-first tap order as the im2col.
    s1, b1 = _bn_fold(p["bn1"])
    w1_t = (p["w1"] * s1).reshape(9, f_in, f_out)
    w1_t = jnp.stack([w1_t[t] for t in _TAP_ORDER], axis=0)
    w1 = _pad_lanes(w1_t.reshape(9 * f_in, f_out), cp)

    s2, b2 = _bn_fold(p["bn2"])
    w2 = jnp.zeros((9, cp, cp), jnp.float32).at[:, :f_out, :f_out].set(
        (p["w2"] * s2).reshape(9, f_out, f_out))
    w2 = w2.reshape(9 * cp, cp)

    # Shortcut weight: projection / identity / disabled, all one tiny matmul.
    if p["use_skip"] and ("ws" in p):
        ss, bsv = _bn_fold(p["bns"])
        ws = _pad_lanes(p["ws"].reshape(f_in, f_out) * ss[None, :], cp)
    elif p["use_skip"]:
        ws = jnp.eye(f_in, cp, dtype=jnp.float32)          # Identity2d shortcut
        bsv = jnp.zeros((f_out,), jnp.float32)
    else:
        ws = jnp.zeros((f_in, cp), jnp.float32)            # no skip connection
        bsv = jnp.zeros((f_out,), jnp.float32)

    b2s = _pad_bias(b2 + bsv, cp)                          # conv2 + shortcut bias

    kernel = functools.partial(_block_kernel, h=ho, w=wo, cin=f_in)
    out = pl.pallas_call(
        kernel,
        out_shape=jax.ShapeDtypeStruct((n, hw, cp), jnp.float32),
        grid=(n,),
        in_specs=[
            pl.BlockSpec((1, hw, 9 * f_in), lambda i: (i, 0, 0)),
            pl.BlockSpec((9 * f_in, cp), lambda i: (0, 0)),
            pl.BlockSpec((1, cp), lambda i: (0, 0)),
            pl.BlockSpec((9 * cp, cp), lambda i: (0, 0)),
            pl.BlockSpec((1, cp), lambda i: (0, 0)),
            pl.BlockSpec((f_in, cp), lambda i: (0, 0)),
        ],
        out_specs=pl.BlockSpec((1, hw, cp), lambda i: (i, 0, 0)),
        scratch_shapes=[pltpu.VMEM((ho + 2, wo + 2, cp), jnp.float32)],
        compiler_params=pltpu.CompilerParams(
            dimension_semantics=("parallel",)),   # batch axis -> v7x dual TC
    )(
        x1.astype(jnp.bfloat16),
        w1.astype(jnp.bfloat16), _pad_bias(b1, cp),
        w2.astype(jnp.bfloat16), b2s,
        ws.astype(jnp.bfloat16),
    )
    out = out[:, :, :f_out].reshape(n, ho, wo, f_out)      # strip lane padding
    return jnp.transpose(out, (0, 3, 1, 2))                # back to NCHW


# ----------------------------------------------------------------------------
# Deterministic parameters (kaiming conv init, inference-mode BN stats)
# ----------------------------------------------------------------------------
def _kaiming_conv(key, k, cin, cout):
    std = (2.0 / (cin * k * k)) ** 0.5
    return jax.random.normal(key, (k, k, cin, cout), jnp.float32) * std  # HWIO


def _bn_params(key, c):
    kg, kb, km, kv = jax.random.split(key, 4)
    gamma = 0.8 + 0.4 * jax.random.uniform(kg, (c,), jnp.float32)
    beta = 0.1 * jax.random.normal(kb, (c,), jnp.float32)
    mean = 0.1 * jax.random.normal(km, (c,), jnp.float32)
    var = 1.0 + 0.5 * jax.random.uniform(kv, (c,), jnp.float32)
    return gamma, beta, mean, var


def make_block_params(key, f_in, f_out, downsample, use_skip_connection=True):
    ks = jax.random.split(key, 6)
    p = {
        "downsample": downsample,
        "use_skip": use_skip_connection,
        "w1": _kaiming_conv(ks[0], 3, f_in, f_out),
        "bn1": _bn_params(ks[1], f_out),
        "w2": _kaiming_conv(ks[2], 3, f_out, f_out),
        "bn2": _bn_params(ks[3], f_out),
    }
    if use_skip_connection and (downsample or f_in != f_out):
        p["ws"] = _kaiming_conv(ks[4], 1, f_in, f_out)
        p["bns"] = _bn_params(ks[5], f_out)
    return p


# ----------------------------------------------------------------------------
# Pure-JAX reference (matches the PyTorch Block.forward)
# ----------------------------------------------------------------------------
def _ref_conv(x_nhwc, w_hwio, stride, pad):
    return jax.lax.conv_general_dilated(
        x_nhwc, w_hwio, (stride, stride), ((pad, pad), (pad, pad)),
        dimension_numbers=("NHWC", "HWIO", "NHWC"))


def _ref_bn(x, bn):
    gamma, beta, mean, var = bn
    return (x - mean) / jnp.sqrt(var + BN_EPS) * gamma + beta


def block_reference(x_nchw, p):
    x = jnp.transpose(x_nchw, (0, 2, 3, 1))
    stride = 2 if p["downsample"] else 1
    out = jax.nn.relu(_ref_bn(_ref_conv(x, p["w1"], stride, 1), p["bn1"]))
    out = _ref_bn(_ref_conv(out, p["w2"], 1, 1), p["bn2"])
    if p["use_skip"]:
        if "ws" in p:
            sc = _ref_bn(_ref_conv(x, p["ws"], 2, 0), p["bns"])
        else:
            sc = x
        out = out + sc
    return jnp.transpose(jax.nn.relu(out), (0, 3, 1, 2))


# ----------------------------------------------------------------------------
if __name__ == "__main__":
    key = jax.random.PRNGKey(0)
    kx, kd, ki, kn = jax.random.split(key, 4)

    N, C, H, W = 2, 4, 16, 16
    x = jax.random.normal(kx, (N, C, H, W), jnp.float32)   # NCHW, like PyTorch

    # Block with downsample + projection shortcut: f_in=4 -> f_out=8, stride 2.
    p_down = make_block_params(kd, 4, 8, downsample=True)
    y_down = jax.block_until_ready(jax.jit(lambda a: block_forward(a, p_down))(x))
    assert y_down.shape == (N, 8, H // 2, W // 2)
    ref_down = jax.block_until_ready(block_reference(x, p_down))
    # bf16 matmul operands -> loosened tolerance vs the f32 reference.
    np.testing.assert_allclose(np.asarray(y_down), np.asarray(ref_down),
                               rtol=5e-2, atol=5e-2)

    # Block with identity shortcut: f_in = f_out = 4, stride 1.
    p_id = make_block_params(ki, 4, 4, downsample=False)
    y_id = jax.block_until_ready(jax.jit(lambda a: block_forward(a, p_id))(x))
    assert y_id.shape == (N, 4, H, W)
    ref_id = jax.block_until_ready(block_reference(x, p_id))
    np.testing.assert_allclose(np.asarray(y_id), np.asarray(ref_id),
                               rtol=5e-2, atol=5e-2)

    # Block with the skip connection disabled.
    p_ns = make_block_params(kn, 4, 4, downsample=False, use_skip_connection=False)
    y_ns = jax.block_until_ready(jax.jit(lambda a: block_forward(a, p_ns))(x))
    assert y_ns.shape == (N, 4, H, W)
    ref_ns = jax.block_until_ready(block_reference(x, p_ns))
    np.testing.assert_allclose(np.asarray(y_ns), np.asarray(ref_ns),
                               rtol=5e-2, atol=5e-2)

    print("KERNEL_OK")
</pallas_src>

<mosaic_0001>
module attributes {stable_mosaic.version = 11 : i64} {
  func.func @_block_kernel(%arg0: i32, %arg1: memref<1x64x36xbf16, #tpu.memory_space<vmem>>, %arg2: memref<36x128xbf16, #tpu.memory_space<vmem>>, %arg3: memref<1x128xf32, #tpu.memory_space<vmem>>, %arg4: memref<1152x128xbf16, #tpu.memory_space<vmem>>, %arg5: memref<1x128xf32, #tpu.memory_space<vmem>>, %arg6: memref<4x128xbf16, #tpu.memory_space<vmem>>, %arg7: memref<1x64x128xf32, #tpu.memory_space<vmem>>, %arg8: memref<10x10x128xf32, #tpu.memory_space<vmem>>) attributes {dimension_semantics = [#tpu.dimension_semantics<parallel>], iteration_bounds = array<i64: 2>, scalar_prefetch = 0 : i64, scratch_operands = 1 : i64, tpu.core_type = #tpu.core_type<tc>, window_params = [{transform_indices = @transform_0, window_bounds = array<i64: 1, 64, 36>}, {pipeline_mode = #tpu.pipeline_mode<synchronous>, transform_indices = @transform_1, window_bounds = array<i64: 36, 128>}, {pipeline_mode = #tpu.pipeline_mode<synchronous>, transform_indices = @transform_2, window_bounds = array<i64: 1, 128>}, {pipeline_mode = #tpu.pipeline_mode<synchronous>, transform_indices = @transform_3, window_bounds = array<i64: 1152, 128>}, {pipeline_mode = #tpu.pipeline_mode<synchronous>, transform_indices = @transform_4, window_bounds = array<i64: 1, 128>}, {pipeline_mode = #tpu.pipeline_mode<synchronous>, transform_indices = @transform_5, window_bounds = array<i64: 4, 128>}, {transform_indices = @transform_6, window_bounds = array<i64: 1, 64, 128>}]} {
    %c0 = arith.constant 0 : index
    %c0_0 = arith.constant 0 : index
    %c0_1 = arith.constant 0 : index
    %0 = vector.load %arg1[%c0, %c0_0, %c0_1] : memref<1x64x36xbf16, #tpu.memory_space<vmem>>, vector<1x64x36xbf16>
    %1 = vector.shape_cast %0 : vector<1x64x36xbf16> to vector<64x36xbf16>
    %c0_2 = arith.constant 0 : index
    %c0_3 = arith.constant 0 : index
    %2 = vector.load %arg2[%c0_2, %c0_3] : memref<36x128xbf16, #tpu.memory_space<vmem>>, vector<36x128xbf16>
    %cst = arith.constant dense<0.000000e+00> : vector<64x128xf32>
    %3 = tpu.matmul %1, %2, %cst {dimension_numbers = #tpu.dot_dimension_numbers<[1], [0], [0], [1], [0, 0, 1, 1], [], []>} : vector<64x36xbf16>, vector<36x128xbf16>, vector<64x128xf32> -> vector<64x128xf32>
    %c0_4 = arith.constant 0 : index
    %c0_5 = arith.constant 0 : index
    %4 = vector.load %arg3[%c0_4, %c0_5] : memref<1x128xf32, #tpu.memory_space<vmem>>, vector<1x128xf32>
    %5 = vector.broadcast %4 : vector<1x128xf32> to vector<64x128xf32>
    %6 = arith.addf %3, %5 : vector<64x128xf32>
    %cst_6 = arith.constant 0.000000e+00 : f32
    %7 = vector.broadcast %cst_6 : f32 to vector<64x128xf32>
    %8 = arith.maximumf %6, %7 : vector<64x128xf32>
    %cst_7 = arith.constant 0.000000e+00 : f32
    %9 = vector.broadcast %cst_7 : f32 to vector<10x10x128xf32>
    %c0_8 = arith.constant 0 : index
    %c0_9 = arith.constant 0 : index
    %c0_10 = arith.constant 0 : index
    %10 = vector.load %arg8[%c0_8, %c0_9, %c0_10] : memref<10x10x128xf32, #tpu.memory_space<vmem>>, vector<10x10x128xf32>
    tpu.vector_store %arg8[%c0_8, %c0_9, %c0_10], %9 {strides = array<i32>} : memref<10x10x128xf32, #tpu.memory_space<vmem>>, vector<10x10x128xf32>,
    %11 = vector.shape_cast %8 : vector<64x128xf32> to vector<8x8x128xf32>
    %c1 = arith.constant 1 : index
    %c1_11 = arith.constant 1 : index
    %c0_12 = arith.constant 0 : index
    %12 = vector.load %arg8[%c1, %c1_11, %c0_12] : memref<10x10x128xf32, #tpu.memory_space<vmem>>, vector<8x8x128xf32>
    tpu.vector_store %arg8[%c1, %c1_11, %c0_12], %11 {strides = array<i32>} : memref<10x10x128xf32, #tpu.memory_space<vmem>>, vector<8x8x128xf32>,
    %c0_13 = arith.constant 0 : index
    %c0_14 = arith.constant 0 : index
    %c0_15 = arith.constant 0 : index
    %13 = vector.load %arg8[%c0_13, %c0_14, %c0_15] : memref<10x10x128xf32, #tpu.memory_space<vmem>>, vector<8x8x128xf32>
    %14 = vector.shape_cast %13 : vector<8x8x128xf32> to vector<64x128xf32>
    %c0_16 = arith.constant 0 : index
    %c1_17 = arith.constant 1 : index
    %c0_18 = arith.constant 0 : index
    %15 = vector.load %arg8[%c0_16, %c1_17, %c0_18] : memref<10x10x128xf32, #tpu.memory_space<vmem>>, vector<8x8x128xf32>
    %16 = vector.shape_cast %15 : vector<8x8x128xf32> to vector<64x128xf32>
    %c0_19 = arith.constant 0 : index
    %c2 = arith.constant 2 : index
    %c0_20 = arith.constant 0 : index
    %17 = vector.load %arg8[%c0_19, %c2, %c0_20] : memref<10x10x128xf32, #tpu.memory_space<vmem>>, vector<8x8x128xf32>
    %18 = vector.shape_cast %17 : vector<8x8x128xf32> to vector<64x128xf32>
    %c1_21 = arith.constant 1 : index
    %c0_22 = arith.constant 0 : index
    %c0_23 = arith.constant 0 : index
    %19 = vector.load %arg8[%c1_21, %c0_22, %c0_23] : memref<10x10x128xf32, #tpu.memory_space<vmem>>, vector<8x8x128xf32>
    %20 = vector.shape_cast %19 : vector<8x8x128xf32> to vector<64x128xf32>
    %c1_24 = arith.constant 1 : index
    %c1_25 = arith.constant 1 : index
    %c0_26 = arith.constant 0 : index
    %21 = vector.load %arg8[%c1_24, %c1_25, %c0_26] : memref<10x10x128xf32, #tpu.memory_space<vmem>>, vector<8x8x128xf32>
    %22 = vector.shape_cast %21 : vector<8x8x128xf32> to vector<64x128xf32>
    %c1_27 = arith.constant 1 : index
    %c2_28 = arith.constant 2 : index
    %c0_29 = arith.constant 0 : index
    %23 = vector.load %arg8[%c1_27, %c2_28, %c0_29] : memref<10x10x128xf32, #tpu.memory_space<vmem>>, vector<8x8x128xf32>
    %24 = vector.shape_cast %23 : vector<8x8x128xf32> to vector<64x128xf32>
    %c2_30 = arith.constant 2 : index
    %c0_31 = arith.constant 0 : index
    %c0_32 = arith.constant 0 : index
    %25 = vector.load %arg8[%c2_30, %c0_31, %c0_32] : memref<10x10x128xf32, #tpu.memory_space<vmem>>, vector<8x8x128xf32>
    %26 = vector.shape_cast %25 : vector<8x8x128xf32> to vector<64x128xf32>
    %c2_33 = arith.constant 2 : index
    %c1_34 = arith.constant 1 : index
    %c0_35 = arith.constant 0 : index
    %27 = vector.load %arg8[%c2_33, %c1_34, %c0_35] : memref<10x10x128xf32, #tpu.memory_space<vmem>>, vector<8x8x128xf32>
    %28 = vector.shape_cast %27 : vector<8x8x128xf32> to vector<64x128xf32>
    %c2_36 = arith.constant 2 : index
    %c2_37 = arith.constant 2 : index
    %c0_38 = arith.constant 0 : index
    %29 = vector.load %arg8[%c2_36, %c2_37, %c0_38] : memref<10x10x128xf32, #tpu.memory_space<vmem>>, vector<8x8x128xf32>
    %30 = vector.shape_cast %29 : vector<8x8x128xf32> to vector<64x128xf32>
    %31 = tpu.concatenate %14, %16, %18, %20, %22, %24, %26, %28, %30 in 1 : vector<64x128xf32>, vector<64x128xf32>, vector<64x128xf32>, vector<64x128xf32>, vector<64x128xf32>, vector<64x128xf32>, vector<64x128xf32>, vector<64x128xf32>, vector<64x128xf32> -> vector<64x1152xf32>
    %32 = arith.truncf %31 : vector<64x1152xf32> to vector<64x1152xbf16>
    %c0_39 = arith.constant 0 : index
    %c0_40 = arith.constant 0 : index
    %33 = vector.load %arg4[%c0_39, %c0_40] : memref<1152x128xbf16, #tpu.memory_space<vmem>>, vector<1152x128xbf16>
    %cst_41 = arith.constant dense<0.000000e+00> : vector<64x128xf32>
    %34 = tpu.matmul %32, %33, %cst_41 {dimension_numbers = #tpu.dot_dimension_numbers<[1], [0], [0], [1], [0, 0, 1, 1], [], []>} : vector<64x1152xbf16>, vector<1152x128xbf16>, vector<64x128xf32> -> vector<64x128xf32>
    %35 = vector.extract_strided_slice %1 {offsets = [0, 0], sizes = [64, 4], strides = [1, 1]} : vector<64x36xbf16> to vector<64x4xbf16>
    %c0_42 = arith.constant 0 : index
    %c0_43 = arith.constant 0 : index
    %36 = vector.load %arg6[%c0_42, %c0_43] : memref<4x128xbf16, #tpu.memory_space<vmem>>, vector<4x128xbf16>
    %cst_44 = arith.constant dense<0.000000e+00> : vector<64x128xf32>
    %37 = tpu.matmul %35, %36, %cst_44 {dimension_numbers = #tpu.dot_dimension_numbers<[1], [0], [0], [1], [0, 0, 1, 1], [], []>} : vector<64x4xbf16>, vector<4x128xbf16>, vector<64x128xf32> -> vector<64x128xf32>
    %38 = arith.addf %34, %37 : vector<64x128xf32>
    %c0_45 = arith.constant 0 : index
    %c0_46 = arith.constant 0 : index
    %39 = vector.load %arg5[%c0_45, %c0_46] : memref<1x128xf32, #tpu.memory_space<vmem>>, vector<1x128xf32>
    %40 = vector.broadcast %39 : vector<1x128xf32> to vector<64x128xf32>
    %41 = arith.addf %38, %40 : vector<64x128xf32>
    %cst_47 = arith.constant 0.000000e+00 : f32
    %42 = vector.broadcast %cst_47 : f32 to vector<64x128xf32>
    %43 = arith.maximumf %41, %42 : vector<64x128xf32>
    %c0_48 = arith.constant 0 : index
    %c0_49 = arith.constant 0 : index
    %c0_50 = arith.constant 0 : index
    %44 = vector.load %arg7[%c0_48, %c0_49, %c0_50] : memref<1x64x128xf32, #tpu.memory_space<vmem>>, vector<1x64x128xf32>
    %45 = vector.shape_cast %44 : vector<1x64x128xf32> to vector<64x128xf32>
    %46 = vector.shape_cast %43 : vector<64x128xf32> to vector<1x64x128xf32>
    tpu.vector_store %arg7[%c0_48, %c0_49, %c0_50], %46 {strides = array<i32>} : memref<1x64x128xf32, #tpu.memory_space<vmem>>, vector<1x64x128xf32>,
    return
  }
  func.func @transform_0(%arg0: i32) -> (i32, i32, i32) {
    %c0_i32 = arith.constant 0 : i32
    %c0_i32_0 = arith.constant 0 : i32
    %c0_i32_1 = arith.constant 0 : i32
    return %arg0, %c0_i32, %c0_i32_0 : i32, i32, i32
  }
  func.func @transform_1(%arg0: i32) -> (i32, i32) {
    %c0_i32 = arith.constant 0 : i32
    %c0_i32_0 = arith.constant 0 : i32
    %c0_i32_1 = arith.constant 0 : i32
    return %c0_i32, %c0_i32_0 : i32, i32
  }
  func.func @transform_2(%arg0: i32) -> (i32, i32) {
    %c0_i32 = arith.constant 0 : i32
    %c0_i32_0 = arith.constant 0 : i32
    %c0_i32_1 = arith.constant 0 : i32
    return %c0_i32, %c0_i32_0 : i32, i32
  }
  func.func @transform_3(%arg0: i32) -> (i32, i32) {
    %c0_i32 = arith.constant 0 : i32
    %c0_i32_0 = arith.constant 0 : i32
    %c0_i32_1 = arith.constant 0 : i32
    return %c0_i32, %c0_i32_0 : i32, i32
  }
  func.func @transform_4(%arg0: i32) -> (i32, i32) {
    %c0_i32 = arith.constant 0 : i32
    %c0_i32_0 = arith.constant 0 : i32
    %c0_i32_1 = arith.constant 0 : i32
    return %c0_i32, %c0_i32_0 : i32, i32
  }
  func.func @transform_5(%arg0: i32) -> (i32, i32) {
    %c0_i32 = arith.constant 0 : i32
    %c0_i32_0 = arith.constant 0 : i32
    %c0_i32_1 = arith.constant 0 : i32
    return %c0_i32, %c0_i32_0 : i32, i32
  }
  func.func @transform_6(%arg0: i32) -> (i32, i32, i32) {
    %c0_i32 = arith.constant 0 : i32
    %c0_i32_0 = arith.constant 0 : i32
    %c0_i32_1 = arith.constant 0 : i32
    return %arg0, %c0_i32, %c0_i32_0 : i32, i32, i32
  }
}

</mosaic_0001>

<llo_original>
// kernel: _lambda_.1
$region0: #{_lambda_.1}
  #allocation0 [shape = 'u32[]', space=smem, size = 0x4, offset = 0x4, fixed_abs, tag = 'smem constant byte address 0x4 - core index']
  #allocation1 [shape = 'u32[144,128]{1,0:T(1,128)}', space=vmem, size = 0x12000, scoped, tag = 'internal scratch']
  #allocation2 [shape = 'f32[10,10,128]{2,1,0:T(8,128)}', space=vmem, size = 0x14000, scoped, tag = 'scratch operand']
  %s0 = inlined_call_operand.vmem [shape: bf16[2,64,36], index: 0, kind: input, shape index: {}]
  %s1 = inlined_call_operand.vmem [shape: bf16[36,128], index: 1, kind: input, shape index: {}]
  %s2 = inlined_call_operand.vmem [shape: f32[1,128], index: 2, kind: input, shape index: {}]
  %s3 = inlined_call_operand.vmem [shape: bf16[1152,128], index: 3, kind: input, shape index: {}]
  %s4 = inlined_call_operand.vmem [shape: f32[1,128], index: 4, kind: input, shape index: {}]
  %s5 = inlined_call_operand.vmem [shape: bf16[4,128], index: 5, kind: input, shape index: {}]
  %s6 = inlined_call_operand.vmem [shape: f32[2,64,128], index: 6, kind: output, shape index: {}]
  %s7 = sld [smem:[#allocation0]]
  $region57: #{_lambda_.1} parent=0
    _
  %s9 = ssub.s32 1, %s7
  %s10 = scalar_select 0, %s9, %s7
  loop: start=0, step=1, limit=4
  $region2: #{_lambda_.1} parent=0 // loop_pre_header
    _
  $region3: #{_lambda_.1} parent=0 // loop_header
    %s12 = sphi 0, %s16
    %p13 = scmp.ge.s32.totalorder %s12, 4
    %s22 = sphi 0, %s24
    %s25 = sphi 0, %s22
    %s26 = sphi 0, %s25
    %s42 = sphi 0, %s26
    %s46 = sphi 0, %s46
    %s48 = sphi 0, %s46
    %s49 = sphi 0, %s48
    %s63 = sphi 0, %s49
    %s67 = sphi 0, %s67
    %s69 = sphi 0, %s67
    %s70 = sphi 0, %s69
    %s84 = sphi 0, %s70
    %s88 = sphi 0, %s88
    %s90 = sphi 0, %s88
    %s91 = sphi 0, %s90
    %s105 = sphi 0, %s91
    %s109 = sphi 0, %s109
    %s111 = sphi 0, %s109
    %s112 = sphi 0, %s111
    %s126 = sphi 0, %s112
    %s130 = sphi 0, %s130
    %s132 = sphi 0, %s130
    %s133 = sphi 0, %s132
    %s147 = sphi 0, %s133
    %s153 = sphi 0, %s155
    %s156 = sphi 0, %s153
    %s157 = sphi 0, %s156
    %s173 = sphi 0, %s157
  $region4: #{_lambda_.1} parent=0 // loop_header_branch
    %15 = sbr.rel (%p13) target = $region8
  $region5: #{_lambda_.1} parent=0 // loop_body
    %s17 = ssub.s32 %s12, 1
    %s18 = ssub.s32 %s12, 2
    %s19 = sadd.s32 %s12, 1
    %s20 = ssub.s32 %s12, %s19
    %p21 = scmp.eq.s32.totalorder %s20, 0
    %s23 = sadd.s32 %s22, 1
    %s24 = scalar_select %p21, %s22, %s23
    %p27 = pneg %p21
    %p28 = scmp.eq.s32.totalorder %s12, 1
    %p29 = por %p27, %p28
    %p30 = scmp.ne.s32.totalorder %s22, %s25
    %p31 = scmp.eq.s32.totalorder %s12, 0
    %p32 = por %p30, %p31
    %p33 = scmp.ne.s32.totalorder %s22, %s25
    %p34 = scmp.eq.s32.totalorder %s17, 1
    %p35 = por %p33, %p34
    %p36 = scmp.ne.s32.totalorder %s25, %s26
    %p37 = scmp.eq.s32.totalorder %s17, 0
    %p38 = por %p36, %p37
    %p39 = scmp.ne.s32.totalorder %s25, %s26
    %p40 = scmp.eq.s32.totalorder %s18, 1
    %p41 = por %p39, %p40
    %p43 = scmp.ne.s32.totalorder %s26, %s42
    %p44 = scmp.eq.s32.totalorder %s18, 0
    %p45 = por %p43, %p44
    %s47 = sadd.s32 %s46, 1
    %p50 = scmp.eq.s32.totalorder %s12, 1
    %p51 = scmp.ne.s32.totalorder %s46, %s48
    %p52 = scmp.eq.s32.totalorder %s12, 0
    %p53 = por %p51, %p52
    %p54 = scmp.ne.s32.totalorder %s46, %s48
    %p55 = scmp.eq.s32.totalorder %s17, 1
    %p56 = por %p54, %p55
    %p57 = scmp.ne.s32.totalorder %s48, %s49
    %p58 = scmp.eq.s32.totalorder %s17, 0
    %p59 = por %p57, %p58
    %p60 = scmp.ne.s32.totalorder %s48, %s49
    %p61 = scmp.eq.s32.totalorder %s18, 1
    %p62 = por %p60, %p61
    %p64 = scmp.ne.s32.totalorder %s49, %s63
    %p65 = scmp.eq.s32.totalorder %s18, 0
    %p66 = por %p64, %p65
    %s68 = sadd.s32 %s67, 1
    %p71 = scmp.eq.s32.totalorder %s12, 1
    %p72 = scmp.ne.s32.totalorder %s67, %s69
    %p73 = scmp.eq.s32.totalorder %s12, 0
    %p74 = por %p72, %p73
    %p75 = scmp.ne.s32.totalorder %s67, %s69
    %p76 = scmp.eq.s32.totalorder %s17, 1
    %p77 = por %p75, %p76
    %p78 = scmp.ne.s32.totalorder %s69, %s70
    %p79 = scmp.eq.s32.totalorder %s17, 0
    %p80 = por %p78, %p79
    %p81 = scmp.ne.s32.totalorder %s69, %s70
    %p82 = scmp.eq.s32.totalorder %s18, 1
    %p83 = por %p81, %p82
    %p85 = scmp.ne.s32.totalorder %s70, %s84
    %p86 = scmp.eq.s32.totalorder %s18, 0
    %p87 = por %p85, %p86
    %s89 = sadd.s32 %s88, 1
    %p92 = scmp.eq.s32.totalorder %s12, 1
    %p93 = scmp.ne.s32.totalorder %s88, %s90
    %p94 = scmp.eq.s32.totalorder %s12, 0
    %p95 = por %p93, %p94
    %p96 = scmp.ne.s32.totalorder %s88, %s90
    %p97 = scmp.eq.s32.totalorder %s17, 1
    %p98 = por %p96, %p97
    %p99 = scmp.ne.s32.totalorder %s90, %s91
    %p100 = scmp.eq.s32.totalorder %s17, 0
    %p101 = por %p99, %p100
    %p102 = scmp.ne.s32.totalorder %s90, %s91
    %p103 = scmp.eq.s32.totalorder %s18, 1
    %p104 = por %p102, %p103
    %p106 = scmp.ne.s32.totalorder %s91, %s105
    %p107 = scmp.eq.s32.totalorder %s18, 0
    %p108 = por %p106, %p107
    %s110 = sadd.s32 %s109, 1
    %p113 = scmp.eq.s32.totalorder %s12, 1
    %p114 = scmp.ne.s32.totalorder %s109, %s111
    %p115 = scmp.eq.s32.totalorder %s12, 0
    %p116 = por %p114, %p115
    %p117 = scmp.ne.s32.totalorder %s109, %s111
    %p118 = scmp.eq.s32.totalorder %s17, 1
    %p119 = por %p117, %p118
    %p120 = scmp.ne.s32.totalorder %s111, %s112
    %p121 = scmp.eq.s32.totalorder %s17, 0
    %p122 = por %p120, %p121
    %p123 = scmp.ne.s32.totalorder %s111, %s112
    %p124 = scmp.eq.s32.totalorder %s18, 1
    %p125 = por %p123, %p124
    %p127 = scmp.ne.s32.totalorder %s112, %s126
    %p128 = scmp.eq.s32.totalorder %s18, 0
    %p129 = por %p127, %p128
    %s131 = sadd.s32 %s130, 1
    %p134 = scmp.eq.s32.totalorder %s12, 1
    %p135 = scmp.ne.s32.totalorder %s130, %s132
    %p136 = scmp.eq.s32.totalorder %s12, 0
    %p137 = por %p135, %p136
    %p138 = scmp.ne.s32.totalorder %s130, %s132
    %p139 = scmp.eq.s32.totalorder %s17, 1
    %p140 = por %p138, %p139
    %p141 = scmp.ne.s32.totalorder %s132, %s133
    %p142 = scmp.eq.s32.totalorder %s17, 0
    %p143 = por %p141, %p142
    %p144 = scmp.ne.s32.totalorder %s132, %s133
    %p145 = scmp.eq.s32.totalorder %s18, 1
    %p146 = por %p144, %p145
    %p148 = scmp.ne.s32.totalorder %s133, %s147
    %p149 = scmp.eq.s32.totalorder %s18, 0
    %p150 = por %p148, %p149
    %s151 = ssub.s32 %s12, %s19
    %p152 = scmp.eq.s32.totalorder %s151, 0
    %s154 = sadd.s32 %s153, 1
    %s155 = scalar_select %p152, %s153, %s154
    %p158 = pneg %p152
    %p159 = scmp.eq.s32.totalorder %s12, 1
    %p160 = por %p158, %p159
    %p161 = scmp.ne.s32.totalorder %s153, %s156
    %p162 = scmp.eq.s32.totalorder %s12, 0
    %p163 = por %p161, %p162
    %p164 = scmp.ne.s32.totalorder %s153, %s156
    %p165 = scmp.eq.s32.totalorder %s17, 1
    %p166 = por %p164, %p165
    %p167 = scmp.ne.s32.totalorder %s156, %s157
    %p168 = scmp.eq.s32.totalorder %s17, 0
    %p169 = por %p167, %p168
    %p170 = scmp.ne.s32.totalorder %s156, %s157
    %p171 = scmp.eq.s32.totalorder %s18, 1
    %p172 = por %p170, %p171
    %p174 = scmp.ne.s32.totalorder %s157, %s173
    %p175 = scmp.eq.s32.totalorder %s18, 0
    %p176 = por %p174, %p175
    %p177 = scmp.le.s32.totalorder 1, %s12
    %p178 = scmp.lt.s32.totalorder %s12, 3
    %p179 = pnand %p177, %p178
    %p180 = pneg %p179
    // Predicated region
    $region9: #{_lambda_.1} parent=5 // pred_check
      _
    $region10: #{_lambda_.1} parent=5 // pred_check_branch
      %182 = sbr.rel (%p179) target = $region12
    $region11: #{_lambda_.1} parent=5 // pred_region
      %s183 = ssub.s32 %s12, 1
      // Predicated region
      $region13: #{_lambda_.1} parent=11 // pred_check
        %p184 = pneg %p59
      $region14: #{_lambda_.1} parent=11 // pred_check_branch
        %186 = sbr.rel (%p184) target = $region16
      $region15: #{_lambda_.1} parent=11 // pred_region
        _
      $region16: #{_lambda_.1} parent=11 // pred_fallthru
        _
      // Predicated region
      $region17: #{_lambda_.1} parent=11 // pred_check
        %p187 = pneg %p80
      $region18: #{_lambda_.1} parent=11 // pred_check_branch
        %189 = sbr.rel (%p187) target = $region20
      $region19: #{_lambda_.1} parent=11 // pred_region
        _
      $region20: #{_lambda_.1} parent=11 // pred_fallthru
        _
      // Predicated region
      $region21: #{_lambda_.1} parent=11 // pred_check
        %p190 = pneg %p101
      $region22: #{_lambda_.1} parent=11 // pred_check_branch
        %192 = sbr.rel (%p190) target = $region24
      $region23: #{_lambda_.1} parent=11 // pred_region
        _
      $region24: #{_lambda_.1} parent=11 // pred_fallthru
        _
      // Predicated region
      $region25: #{_lambda_.1} parent=11 // pred_check
        %p193 = pneg %p122
      $region26: #{_lambda_.1} parent=11 // pred_check_branch
        %195 = sbr.rel (%p193) target = $region28
      $region27: #{_lambda_.1} parent=11 // pred_region
        _
      $region28: #{_lambda_.1} parent=11 // pred_fallthru
        _
      // Predicated region
      $region29: #{_lambda_.1} parent=11 // pred_check
        %p196 = pneg %p143
      $region30: #{_lambda_.1} parent=11 // pred_check_branch
        %198 = sbr.rel (%p196) target = $region32
      $region31: #{_lambda_.1} parent=11 // pred_region
        _
      $region32: #{_lambda_.1} parent=11 // pred_fallthru
        _
    $region12: #{_lambda_.1} parent=5 // pred_fallthru
      _
    %p199 = scmp.lt.s32.totalorder %s12, 2
    // Predicated region
    $region33: #{_lambda_.1} parent=5 // pred_check
      %p200 = pneg %p199
    $region34: #{_lambda_.1} parent=5 // pred_check_branch
      %202 = sbr.rel (%p200) target = $region36
    $region35: #{_lambda_.1} parent=5 // pred_region
      // Predicated region
      $region37: #{_lambda_.1} parent=35 // pred_check
        %p203 = pneg %p32
      $region38: #{_lambda_.1} parent=35 // pred_check_branch
        %205 = sbr.rel (%p203) target = $region40
      $region39: #{_lambda_.1} parent=35 // pred_region
        %p206 = scmp.lt.s32.totalorder %s12, 1
        %s207 = scalar_select %p206, %s12, 1
        %s208 = smul.addr %s207, 8
        %s209 = smul.addr %s208, 4
        %s210 = scalar_lea.vmem %s0, %s209
      $region40: #{_lambda_.1} parent=35 // pred_fallthru
        _
    $region36: #{_lambda_.1} parent=5 // pred_fallthru
      _
    %p211 = scmp.le.s32.totalorder 1, %s12
    %p212 = scmp.lt.s32.totalorder %s12, 3
    %p213 = pnand %p211, %p212
    %p214 = pneg %p213
    // Predicated region
    $region41: #{_lambda_.1} parent=5 // pred_check
      _
    $region42: #{_lambda_.1} parent=5 // pred_check_branch
      %216 = sbr.rel (%p213) target = $region44
    $region43: #{_lambda_.1} parent=5 // pred_region
      %s217 = ssub.s32 %s12, 1
      %p218 = scmp.lt.s32.totalorder %s17, 1
      %s219 = scalar_select %p218, %s17, 1
      %s220 = smul.addr %s219, 8
      %s221 = smul.addr %s220, 4
      %s222 = scalar_lea.vmem %s0, %s221
      %p223 = pneg %p38
      %p224 = pneg %p35
      %p225 = pneg %p59
      %p226 = pneg %p56
      %p227 = pneg %p80
      %p228 = pneg %p77
      %p229 = pneg %p101
      %p230 = pneg %p98
      %p231 = pneg %p122
      %p232 = pneg %p119
      %p233 = pneg %p143
      %p234 = pneg %p140
      %p235 = pneg %p169
      %p236 = pneg %p166
      %p237 = scmp.lt.s32.totalorder %s17, 1
      %s238 = scalar_select %p237, %s17, 1
      %s239 = smul.addr %s238, 8
      %s240 = smul.addr %s239, 8
      %s241 = scalar_lea.vmem %s6, %s240
      %p242 = scmp.lt.s32.totalorder %s17, 1
      %s243 = scalar_select %p242, %s17, 1
      %s244 = smul.addr %s243, 8
      %s245 = smul.addr %s244, 4
      %s246 = scalar_lea.vmem %s0, %s245
      %p247 = scmp.lt.s32.totalorder %s17, 1
      %s248 = scalar_select %p247, %s17, 1
      %s249 = smul.addr %s248, 8
      %s250 = smul.addr %s249, 8
      %s251 = scalar_lea.vmem %s6, %s250
      %v253 = vld [vmem:[%s246] sm:$0xf]
      %v254 = vld [vmem:[%s246 + $0x4] sm:$0xf]
      %v255 = vld [vmem:[%s246 + $0x8] sm:$0xf]
      %v256 = vld [vmem:[%s246 + $0xc] sm:$0xf]
      %v257 = vld [vmem:[%s246 + $0x10] sm:$0xf]
      %v258 = vld [vmem:[%s246 + $0x14] sm:$0xf]
      %v259 = vld [vmem:[%s246 + $0x18] sm:$0xf]
      %v260 = vld [vmem:[%s246 + $0x1c] sm:$0xf]
      %v261 = vld [vmem:[%s1] sm:$0xf]
      %v262 = vld [vmem:[%s1 + $0x4] sm:$0xf]
      %v263 = vld [vmem:[%s1 + $0x8] sm:$0xf]
      %v264 = vld [vmem:[%s1 + $0xc] sm:$0xf]
      %v265 = vld [vmem:[%s1 + $0x10] sm:$0x3]
      %v266 = vld [vmem:[%s2] sm:$0x1]
      %v268 = vlaneseq
      %v269 = vshrl.u32 %v268, 7
      %v270 = vsub.s32 0, %v269
      %v271 = vrot.slane %v266, %v270
      %v281 = vunpack.c.l.b16 %v253
      %v282 = vunpack.c.l.b16 %v254
      %v283 = vunpack.c.l.b16 %v255
      %v284 = vunpack.c.l.b16 %v256
      %v285 = vunpack.c.l.b16 %v257
      %v286 = vunpack.c.l.b16 %v258
      %v287 = vunpack.c.l.b16 %v259
      %v288 = vunpack.c.l.b16 %v260
      %v289 = vpack.c.b16 %v282, %v281
      %v290 = vpack.c.b16 %v284, %v283
      %v291 = vpack.c.b16 %v286, %v285
      %v292 = vpack.c.b16 %v288, %v287
      %v298 = vunpack.c.l.b16 %v261
      %v299 = vunpack.c.l.b16 %v262
      %v300 = vunpack.c.l.b16 %v263
      %v301 = vunpack.c.l.b16 %v264
      %v302 = vunpack.c.l.b16 %v265
      %v303 = vpack.c.b16 %v299, %v298
      %v304 = vpack.c.b16 %v301, %v300
      %v305 = vpack.c.b16 %v302, %v302
      %vm308 = vcmask 293888
      %v310 = vsel %vm308, %v289, 0
      %v313 = vsel %vm308, %v290, 0
      %v316 = vsel %vm308, %v291, 0
      %v319 = vsel %vm308, %v292, 0
      %vm321 = vcmask 1041408
      %v323 = vsel %vm321, %v305, 0
      %325 = vmatprep.subr.bf16.mxu0 0
      %326 = vmatpush1.bf16.msra.mxu0 0
      %327 = vmatprep.subr.bf16.mxu0 0
      %328 = vmatpush1.bf16.msra.mxu0 0
      %329 = vmatprep.subr.bf16.mxu0 0
      %330 = vmatpush1.bf16.msra.mxu0 0
      %331 = vmatprep.subr.bf16.mxu0 0
      %332 = vmatpush1.bf16.msra.mxu0 0
      %333 = vmatprep.subr.bf16.mxu0 0
      %334 = vmatpush1.bf16.msra.mxu0 0
      %335 = vmatprep.subr.bf16.mxu0 0
      %336 = vmatpush1.bf16.msra.mxu0 %v323
      %337 = vmatprep.subr.bf16.mxu0 0
      %338 = vmatpush1.bf16.msra.mxu0 %v304
      %339 = vmatprep.subr.bf16.mxu0 0
      %340 = vmatpush1.bf16.msra.mxu0 %v303
      %341 = vmatprep.subr.bf16.mxu0 0
      %342 = vmatpush2.bf16.msra.mxu0 0
      %343 = vmatprep.subr.bf16.mxu0 0
      %344 = vmatpush2.bf16.msra.mxu0 0
      %345 = vmatprep.subr.bf16.mxu0 0
      %346 = vmatpush2.bf16.msra.mxu0 0
      %347 = vmatprep.subr.bf16.mxu0 0
      %348 = vmatpush2.bf16.msra.mxu0 0
      %349 = vmatprep.subr.bf16.mxu0 0
      %350 = vmatpush2.bf16.msra.mxu0 0
      %351 = vmatprep.subr.bf16.mxu0 0
      %352 = vmatpush2.bf16.msra.mxu0 0
      %353 = vmatprep.subr.bf16.mxu0 0
      %354 = vmatpush2.bf16.msra.mxu0 0
      %355 = vmatprep.subr.bf16.mxu0 0
      %356 = vmatpush2.bf16.msra.mxu0 0
      %357 = vmatprep.mubr.bf16.mxu0 0
      %358 = vmatmul.mubr.bf16.gmra.mxu0 %v310
      %v359 = vpop.f32.mrf.mxu0
      %v360 = vadd.f32 %v271, %v359
      %v361 = vpop.f32.mrf.mxu0
      %v362 = vpop.f32.mrf.mxu0
      %v363 = vadd.f32 %v271, %v362
      %v364 = vpop.f32.mrf.mxu0
      %365 = vmatprep.mubr.bf16.mxu0 0
      %366 = vmatmul.mubr.bf16.gmra.mxu0 %v313
      %v367 = vpop.f32.mrf.mxu0
      %v368 = vadd.f32 %v271, %v367
      %v369 = vpop.f32.mrf.mxu0
      %v370 = vpop.f32.mrf.mxu0
      %v371 = vadd.f32 %v271, %v370
      %v372 = vpop.f32.mrf.mxu0
      %373 = vmatprep.mubr.bf16.mxu0 0
      %374 = vmatmul.mubr.bf16.gmra.mxu0 %v316
      %v375 = vpop.f32.mrf.mxu0
      %v376 = vadd.f32 %v271, %v375
      %v377 = vpop.f32.mrf.mxu0
      %v378 = vpop.f32.mrf.mxu0
      %v379 = vadd.f32 %v271, %v378
      %v380 = vpop.f32.mrf.mxu0
      %381 = vmatprep.mubr.bf16.mxu0 0
      %382 = vmatmul.mubr.bf16.gmra.mxu0 %v319
      %v383 = vpop.f32.mrf.mxu0
      %v384 = vadd.f32 %v271, %v383
      %v385 = vpop.f32.mrf.mxu0
      %v386 = vpop.f32.mrf.mxu0
      %v387 = vadd.f32 %v271, %v386
      %v388 = vpop.f32.mrf.mxu0
      %389 = vdwg.mxu0
      %v390 = vmax.f32 %v360, 0.0
      %v391 = vmax.f32 %v363, 0.0
      %v392 = vmax.f32 %v368, 0.0
      %v393 = vmax.f32 %v371, 0.0
      %v394 = vmax.f32 %v376, 0.0
      %v395 = vmax.f32 %v379, 0.0
      %v396 = vmax.f32 %v384, 0.0
      %v397 = vmax.f32 %v387, 0.0
      %398 = vst [vmem:[#allocation2] sm:$0xff] 0.0
      %399 = vst [vmem:[#allocation2 + $0x8] sm:$0x3] 0.0
      %400 = vst [vmem:[#allocation2 + $0x10] sm:$0xff] 0.0
      %401 = vst [vmem:[#allocation2 + $0x18] sm:$0x3] 0.0
      %402 = vst [vmem:[#allocation2 + $0x20] sm:$0xff] 0.0
      %403 = vst [vmem:[#allocation2 + $0x28] sm:$0x3] 0.0
      %404 = vst [vmem:[#allocation2 + $0x30] sm:$0xff] 0.0
      %405 = vst [vmem:[#allocation2 + $0x38] sm:$0x3] 0.0
      %406 = vst [vmem:[#allocation2 + $0x40] sm:$0xff] 0.0
      %407 = vst [vmem:[#allocation2 + $0x48] sm:$0x3] 0.0
      %408 = vst [vmem:[#allocation2 + $0x50] sm:$0xff] 0.0
      %409 = vst [vmem:[#allocation2 + $0x58] sm:$0x3] 0.0
      %410 = vst [vmem:[#allocation2 + $0x60] sm:$0xff] 0.0
      %411 = vst [vmem:[#allocation2 + $0x68] sm:$0x3] 0.0
      %412 = vst [vmem:[#allocation2 + $0x70] sm:$0xff] 0.0
      %413 = vst [vmem:[#allocation2 + $0x78] sm:$0x3] 0.0
      %414 = vst [vmem:[#allocation2 + $0x80] sm:$0xff] 0.0
      %415 = vst [vmem:[#allocation2 + $0x88] sm:$0x3] 0.0
      %416 = vst [vmem:[#allocation2 + $0x90] sm:$0xff] 0.0
      %417 = vst [vmem:[#allocation2 + $0x98] sm:$0x3] 0.0
      %s418 = scalar_lea.vmem [#allocation2], 16
      %419 = vst [vmem:[%s418 + $0x1] sm:$0xff] %v390
      %420 = vst [vmem:[%s418 + $0x11] sm:$0xff] %v391
      %421 = vst [vmem:[%s418 + $0x21] sm:$0xff] %v392
      %422 = vst [vmem:[%s418 + $0x31] sm:$0xff] %v393
      %423 = vst [vmem:[%s418 + $0x41] sm:$0xff] %v394
      %424 = vst [vmem:[%s418 + $0x51] sm:$0xff] %v395
      %425 = vst [vmem:[%s418 + $0x61] sm:$0xff] %v396
      %426 = vst [vmem:[%s418 + $0x71] sm:$0xff] %v397
      %v427 = vld [vmem:[#allocation2] sm:$0xff]
      %v428 = vld [vmem:[#allocation2 + $0x10] sm:$0xff]
      %v429 = vld [vmem:[#allocation2 + $0x20] sm:$0xff]
      %v430 = vld [vmem:[#allocation2 + $0x30] sm:$0xff]
      %v431 = vld [vmem:[#allocation2 + $0x40] sm:$0xff]
      %v432 = vld [vmem:[#allocation2 + $0x50] sm:$0xff]
      %v433 = vld [vmem:[#allocation2 + $0x60] sm:$0xff]
      %v434 = vld [vmem:[#allocation2 + $0x70] sm:$0xff]
      %v435 = vld [vmem:[#allocation2 + $0x1] sm:$0xff]
      %v436 = vld [vmem:[#allocation2 + $0x11] sm:$0xff]
      %v437 = vld [vmem:[#allocation2 + $0x21] sm:$0xff]
      %v438 = vld [vmem:[#allocation2 + $0x31] sm:$0xff]
      %v439 = vld [vmem:[#allocation2 + $0x41] sm:$0xff]
      %v440 = vld [vmem:[#allocation2 + $0x51] sm:$0xff]
      %v441 = vld [vmem:[#allocation2 + $0x61] sm:$0xff]
      %v442 = vld [vmem:[#allocation2 + $0x71] sm:$0xff]
      %v443 = vld [vmem:[#allocation2 + $0x2] sm:$0xff]
      %v444 = vld [vmem:[#allocation2 + $0x12] sm:$0xff]
      %v445 = vld [vmem:[#allocation2 + $0x22] sm:$0xff]
      %v446 = vld [vmem:[#allocation2 + $0x32] sm:$0xff]
      %v447 = vld [vmem:[#allocation2 + $0x42] sm:$0xff]
      %v448 = vld [vmem:[#allocation2 + $0x52] sm:$0xff]
      %v449 = vld [vmem:[#allocation2 + $0x62] sm:$0xff]
      %v450 = vld [vmem:[#allocation2 + $0x72] sm:$0xff]
      %v451 = vld [vmem:[%s418] sm:$0xff]
      %v452 = vld [vmem:[%s418 + $0x10] sm:$0xff]
      %v453 = vld [vmem:[%s418 + $0x20] sm:$0xff]
      %v454 = vld [vmem:[%s418 + $0x30] sm:$0xff]
      %v455 = vld [vmem:[%s418 + $0x40] sm:$0xff]
      %v456 = vld [vmem:[%s418 + $0x50] sm:$0xff]
      %v457 = vld [vmem:[%s418 + $0x60] sm:$0xff]
      %v458 = vld [vmem:[%s418 + $0x70] sm:$0xff]
      %v459 = vld [vmem:[%s418 + $0x1] sm:$0xff]
      %v460 = vld [vmem:[%s418 + $0x11] sm:$0xff]
      %v461 = vld [vmem:[%s418 + $0x21] sm:$0xff]
      %v462 = vld [vmem:[%s418 + $0x31] sm:$0xff]
      %v463 = vld [vmem:[%s418 + $0x41] sm:$0xff]
      %v464 = vld [vmem:[%s418 + $0x51] sm:$0xff]
      %v465 = vld [vmem:[%s418 + $0x61] sm:$0xff]
      %v466 = vld [vmem:[%s418 + $0x71] sm:$0xff]
      %v467 = vld [vmem:[%s418 + $0x2] sm:$0xff]
      %v468 = vld [vmem:[%s418 + $0x12] sm:$0xff]
      %v469 = vld [vmem:[%s418 + $0x22] sm:$0xff]
      %v470 = vld [vmem:[%s418 + $0x32] sm:$0xff]
      %v471 = vld [vmem:[%s418 + $0x42] sm:$0xff]
      %v472 = vld [vmem:[%s418 + $0x52] sm:$0xff]
      %v473 = vld [vmem:[%s418 + $0x62] sm:$0xff]
      %v474 = vld [vmem:[%s418 + $0x72] sm:$0xff]
      %s475 = scalar_lea.vmem [#allocation2], 32
      %v476 = vld [vmem:[%s475] sm:$0xff]
      %v477 = vld [vmem:[%s475 + $0x10] sm:$0xff]
      %v478 = vld [vmem:[%s475 + $0x20] sm:$0xff]
      %v479 = vld [vmem:[%s475 + $0x30] sm:$0xff]
      %v480 = vld [vmem:[%s475 + $0x40] sm:$0xff]
      %v481 = vld [vmem:[%s475 + $0x50] sm:$0xff]
      %v482 = vld [vmem:[%s475 + $0x60] sm:$0xff]
      %v483 = vld [vmem:[%s475 + $0x70] sm:$0xff]
      %v484 = vld [vmem:[%s475 + $0x1] sm:$0xff]
      %v485 = vld [vmem:[%s475 + $0x11] sm:$0xff]
      %v486 = vld [vmem:[%s475 + $0x21] sm:$0xff]
      %v487 = vld [vmem:[%s475 + $0x31] sm:$0xff]
      %v488 = vld [vmem:[%s475 + $0x41] sm:$0xff]
      %v489 = vld [vmem:[%s475 + $0x51] sm:$0xff]
      %v490 = vld [vmem:[%s475 + $0x61] sm:$0xff]
      %v491 = vld [vmem:[%s475 + $0x71] sm:$0xff]
      %v492 = vld [vmem:[%s475 + $0x2] sm:$0xff]
      %v493 = vld [vmem:[%s475 + $0x12] sm:$0xff]
      %v494 = vld [vmem:[%s475 + $0x22] sm:$0xff]
      %v495 = vld [vmem:[%s475 + $0x32] sm:$0xff]
      %v496 = vld [vmem:[%s475 + $0x42] sm:$0xff]
      %v497 = vld [vmem:[%s475 + $0x52] sm:$0xff]
      %v498 = vld [vmem:[%s475 + $0x62] sm:$0xff]
      %v499 = vld [vmem:[%s475 + $0x72] sm:$0xff]
      %v500 = vpack.c.bf16 %v428, %v427
      %v501 = vpack.c.bf16 %v436, %v435
      %v502 = vpack.c.bf16 %v444, %v443
      %v503 = vpack.c.bf16 %v452, %v451
      %v504 = vpack.c.bf16 %v460, %v459
      %v505 = vpack.c.bf16 %v468, %v467
      %v506 = vpack.c.bf16 %v477, %v476
      %v507 = vpack.c.bf16 %v485, %v484
      %v508 = vpack.c.bf16 %v493, %v492
      %v509 = vpack.c.bf16 %v430, %v429
      %v510 = vpack.c.bf16 %v438, %v437
      %v511 = vpack.c.bf16 %v446, %v445
      %v512 = vpack.c.bf16 %v454, %v453
      %v513 = vpack.c.bf16 %v462, %v461
      %v514 = vpack.c.bf16 %v470, %v469
      %v515 = vpack.c.bf16 %v479, %v478
      %v516 = vpack.c.bf16 %v487, %v486
      %v517 = vpack.c.bf16 %v495, %v494
      %v518 = vpack.c.bf16 %v432, %v431
      %v519 = vpack.c.bf16 %v440, %v439
      %v520 = vpack.c.bf16 %v448, %v447
      %v521 = vpack.c.bf16 %v456, %v455
      %v522 = vpack.c.bf16 %v464, %v463
      %v523 = vpack.c.bf16 %v472, %v471
      %v524 = vpack.c.bf16 %v481, %v480
      %v525 = vpack.c.bf16 %v489, %v488
      %v526 = vpack.c.bf16 %v497, %v496
      %v527 = vpack.c.bf16 %v434, %v433
      %v528 = vpack.c.bf16 %v442, %v441
      %v529 = vpack.c.bf16 %v450, %v449
      %v530 = vpack.c.bf16 %v458, %v457
      %v531 = vpack.c.bf16 %v466, %v465
      %v532 = vpack.c.bf16 %v474, %v473
      %v533 = vpack.c.bf16 %v483, %v482
      %v534 = vpack.c.bf16 %v491, %v490
      %v535 = vpack.c.bf16 %v499, %v498
      %v536 = vld [vmem:[%s3] sm:$0xf]
      %v537 = vld [vmem:[%s3 + $0x4] sm:$0xf]
      %v538 = vld [vmem:[%s3 + $0x8] sm:$0xf]
      %v539 = vld [vmem:[%s3 + $0xc] sm:$0xf]
      %v540 = vld [vmem:[%s3 + $0x10] sm:$0xf]
      %v541 = vld [vmem:[%s3 + $0x14] sm:$0xf]
      %v542 = vld [vmem:[%s3 + $0x18] sm:$0xf]
      %v543 = vld [vmem:[%s3 + $0x1c] sm:$0xf]
      %v544 = vld [vmem:[%s3 + $0x20] sm:$0xf]
      %v545 = vld [vmem:[%s3 + $0x24] sm:$0xf]
      %v546 = vld [vmem:[%s3 + $0x28] sm:$0xf]
      %v547 = vld [vmem:[%s3 + $0x2c] sm:$0xf]
      %v548 = vld [vmem:[%s3 + $0x30] sm:$0xf]
      %v549 = vld [vmem:[%s3 + $0x34] sm:$0xf]
      %v550 = vld [vmem:[%s3 + $0x38] sm:$0xf]
      %v551 = vld [vmem:[%s3 + $0x3c] sm:$0xf]
      %v552 = vld [vmem:[%s3 + $0x40] sm:$0xf]
      %v553 = vld [vmem:[%s3 + $0x44] sm:$0xf]
      %v554 = vld [vmem:[%s3 + $0x48] sm:$0xf]
      %v555 = vld [vmem:[%s3 + $0x4c] sm:$0xf]
      %v556 = vld [vmem:[%s3 + $0x50] sm:$0xf]
      %v557 = vld [vmem:[%s3 + $0x54] sm:$0xf]
      %v558 = vld [vmem:[%s3 + $0x58] sm:$0xf]
      %v559 = vld [vmem:[%s3 + $0x5c] sm:$0xf]
      %v560 = vld [vmem:[%s3 + $0x60] sm:$0xf]
      %v561 = vld [vmem:[%s3 + $0x64] sm:$0xf]
      %v562 = vld [vmem:[%s3 + $0x68] sm:$0xf]
      %v563 = vld [vmem:[%s3 + $0x6c] sm:$0xf]
      %v564 = vld [vmem:[%s3 + $0x70] sm:$0xf]
      %v565 = vld [vmem:[%s3 + $0x74] sm:$0xf]
      %v566 = vld [vmem:[%s3 + $0x78] sm:$0xf]
      %v567 = vld [vmem:[%s3 + $0x7c] sm:$0xf]
      %v568 = vld [vmem:[%s3 + $0x80] sm:$0xf]
      %v569 = vld [vmem:[%s3 + $0x84] sm:$0xf]
      %v570 = vld [vmem:[%s3 + $0x88] sm:$0xf]
      %v571 = vld [vmem:[%s3 + $0x8c] sm:$0xf]
      %v572 = vld [vmem:[%s3 + $0x90] sm:$0xf]
      %v573 = vld [vmem:[%s3 + $0x94] sm:$0xf]
      %v574 = vld [vmem:[%s3 + $0x98] sm:$0xf]
      %v575 = vld [vmem:[%s3 + $0x9c] sm:$0xf]
      %v576 = vld [vmem:[%s3 + $0xa0] sm:$0xf]
      %v577 = vld [vmem:[%s3 + $0xa4] sm:$0xf]
      %v578 = vld [vmem:[%s3 + $0xa8] sm:$0xf]
      %v579 = vld [vmem:[%s3 + $0xac] sm:$0xf]
      %v580 = vld [vmem:[%s3 + $0xb0] sm:$0xf]
      %v581 = vld [vmem:[%s3 + $0xb4] sm:$0xf]
      %v582 = vld [vmem:[%s3 + $0xb8] sm:$0xf]
      %v583 = vld [vmem:[%s3 + $0xbc] sm:$0xf]
      %v584 = vld [vmem:[%s3 + $0xc0] sm:$0xf]
      %v585 = vld [vmem:[%s3 + $0xc4] sm:$0xf]
      %v586 = vld [vmem:[%s3 + $0xc8] sm:$0xf]
      %v587 = vld [vmem:[%s3 + $0xcc] sm:$0xf]
      %v588 = vld [vmem:[%s3 + $0xd0] sm:$0xf]
      %v589 = vld [vmem:[%s3 + $0xd4] sm:$0xf]
      %v590 = vld [vmem:[%s3 + $0xd8] sm:$0xf]
      %v591 = vld [vmem:[%s3 + $0xdc] sm:$0xf]
      %v592 = vld [vmem:[%s3 + $0xe0] sm:$0xf]
      %v593 = vld [vmem:[%s3 + $0xe4] sm:$0xf]
      %v594 = vld [vmem:[%s3 + $0xe8] sm:$0xf]
      %v595 = vld [vmem:[%s3 + $0xec] sm:$0xf]
      %v596 = vld [vmem:[%s3 + $0xf0] sm:$0xf]
      %v597 = vld [vmem:[%s3 + $0xf4] sm:$0xf]
      %v598 = vld [vmem:[%s3 + $0xf8] sm:$0xf]
      %v599 = vld [vmem:[%s3 + $0xfc] sm:$0xf]
      %v600 = vld [vmem:[%s3 + $0x100] sm:$0xf]
      %v601 = vld [vmem:[%s3 + $0x104] sm:$0xf]
      %v602 = vld [vmem:[%s3 + $0x108] sm:$0xf]
      %v603 = vld [vmem:[%s3 + $0x10c] sm:$0xf]
      %v604 = vld [vmem:[%s3 + $0x110] sm:$0xf]
      %v605 = vld [vmem:[%s3 + $0x114] sm:$0xf]
      %v606 = vld [vmem:[%s3 + $0x118] sm:$0xf]
      %v607 = vld [vmem:[%s3 + $0x11c] sm:$0xf]
      %v608 = vld [vmem:[%s3 + $0x120] sm:$0xf]
      %v609 = vld [vmem:[%s3 + $0x124] sm:$0xf]
      %v610 = vld [vmem:[%s3 + $0x128] sm:$0xf]
      %v611 = vld [vmem:[%s3 + $0x12c] sm:$0xf]
      %v612 = vld [vmem:[%s3 + $0x130] sm:$0xf]
      %v613 = vld [vmem:[%s3 + $0x134] sm:$0xf]
      %v614 = vld [vmem:[%s3 + $0x138] sm:$0xf]
      %v615 = vld [vmem:[%s3 + $0x13c] sm:$0xf]
      %v616 = vld [vmem:[%s3 + $0x140] sm:$0xf]
      %v617 = vld [vmem:[%s3 + $0x144] sm:$0xf]
      %v618 = vld [vmem:[%s3 + $0x148] sm:$0xf]
      %v619 = vld [vmem:[%s3 + $0x14c] sm:$0xf]
      %v620 = vld [vmem:[%s3 + $0x150] sm:$0xf]
      %v621 = vld [vmem:[%s3 + $0x154] sm:$0xf]
      %v622 = vld [vmem:[%s3 + $0x158] sm:$0xf]
      %v623 = vld [vmem:[%s3 + $0x15c] sm:$0xf]
      %v624 = vld [vmem:[%s3 + $0x160] sm:$0xf]
      %v625 = vld [vmem:[%s3 + $0x164] sm:$0xf]
      %v626 = vld [vmem:[%s3 + $0x168] sm:$0xf]
      %v627 = vld [vmem:[%s3 + $0x16c] sm:$0xf]
      %v628 = vld [vmem:[%s3 + $0x170] sm:$0xf]
      %v629 = vld [vmem:[%s3 + $0x174] sm:$0xf]
      %v630 = vld [vmem:[%s3 + $0x178] sm:$0xf]
      %v631 = vld [vmem:[%s3 + $0x17c] sm:$0xf]
      %v632 = vld [vmem:[%s3 + $0x180] sm:$0xf]
      %v633 = vld [vmem:[%s3 + $0x184] sm:$0xf]
      %v634 = vld [vmem:[%s3 + $0x188] sm:$0xf]
      %v635 = vld [vmem:[%s3 + $0x18c] sm:$0xf]
      %v636 = vld [vmem:[%s3 + $0x190] sm:$0xf]
      %v637 = vld [vmem:[%s3 + $0x194] sm:$0xf]
      %v638 = vld [vmem:[%s3 + $0x198] sm:$0xf]
      %v639 = vld [vmem:[%s3 + $0x19c] sm:$0xf]
      %v640 = vld [vmem:[%s3 + $0x1a0] sm:$0xf]
      %v641 = vld [vmem:[%s3 + $0x1a4] sm:$0xf]
      %v642 = vld [vmem:[%s3 + $0x1a8] sm:$0xf]
      %v643 = vld [vmem:[%s3 + $0x1ac] sm:$0xf]
      %v644 = vld [vmem:[%s3 + $0x1b0] sm:$0xf]
      %v645 = vld [vmem:[%s3 + $0x1b4] sm:$0xf]
      %v646 = vld [vmem:[%s3 + $0x1b8] sm:$0xf]
      %v647 = vld [vmem:[%s3 + $0x1bc] sm:$0xf]
      %v648 = vld [vmem:[%s3 + $0x1c0] sm:$0xf]
      %v649 = vld [vmem:[%s3 + $0x1c4] sm:$0xf]
      %v650 = vld [vmem:[%s3 + $0x1c8] sm:$0xf]
      %v651 = vld [vmem:[%s3 + $0x1cc] sm:$0xf]
      %v652 = vld [vmem:[%s3 + $0x1d0] sm:$0xf]
      %v653 = vld [vmem:[%s3 + $0x1d4] sm:$0xf]
      %v654 = vld [vmem:[%s3 + $0x1d8] sm:$0xf]
      %v655 = vld [vmem:[%s3 + $0x1dc] sm:$0xf]
      %v656 = vld [vmem:[%s3 + $0x1e0] sm:$0xf]
      %v657 = vld [vmem:[%s3 + $0x1e4] sm:$0xf]
      %v658 = vld [vmem:[%s3 + $0x1e8] sm:$0xf]
      %v659 = vld [vmem:[%s3 + $0x1ec] sm:$0xf]
      %v660 = vld [vmem:[%s3 + $0x1f0] sm:$0xf]
      %v661 = vld [vmem:[%s3 + $0x1f4] sm:$0xf]
      %v662 = vld [vmem:[%s3 + $0x1f8] sm:$0xf]
      %v663 = vld [vmem:[%s3 + $0x1fc] sm:$0xf]
      %v664 = vld [vmem:[%s3 + $0x200] sm:$0xf]
      %v665 = vld [vmem:[%s3 + $0x204] sm:$0xf]
      %v666 = vld [vmem:[%s3 + $0x208] sm:$0xf]
      %v667 = vld [vmem:[%s3 + $0x20c] sm:$0xf]
      %v668 = vld [vmem:[%s3 + $0x210] sm:$0xf]
      %v669 = vld [vmem:[%s3 + $0x214] sm:$0xf]
      %v670 = vld [vmem:[%s3 + $0x218] sm:$0xf]
      %v671 = vld [vmem:[%s3 + $0x21c] sm:$0xf]
      %v672 = vld [vmem:[%s3 + $0x220] sm:$0xf]
      %v673 = vld [vmem:[%s3 + $0x224] sm:$0xf]
      %v674 = vld [vmem:[%s3 + $0x228] sm:$0xf]
      %v675 = vld [vmem:[%s3 + $0x22c] sm:$0xf]
      %v676 = vld [vmem:[%s3 + $0x230] sm:$0xf]
      %v677 = vld [vmem:[%s3 + $0x234] sm:$0xf]
      %v678 = vld [vmem:[%s3 + $0x238] sm:$0xf]
      %v679 = vld [vmem:[%s3 + $0x23c] sm:$0xf]
      %v680 = vld [vmem:[%s5] sm:$0x3]
      %vm681 = vcmask 31744
      %v682 = vsel %vm681, %v289, 0
      %v684 = vsel %vm681, %v290, 0
      %v686 = vsel %vm681, %v291, 0
      %v688 = vsel %vm681, %v292, 0
      %v691 = vsel %vm321, %v680, 0
      %693 = vmatprep.subr.bf16.mxu0 0
      %694 = vmatpush1.bf16.msra.mxu0 0
      %695 = vmatprep.subr.bf16.mxu0 0
      %696 = vmatpush1.bf16.msra.mxu0 0
      %697 = vmatprep.subr.bf16.mxu0 0
      %698 = vmatpush1.bf16.msra.mxu0 0
      %699 = vmatprep.subr.bf16.mxu0 0
      %700 = vmatpush1.bf16.msra.mxu0 0
      %701 = vmatprep.subr.bf16.mxu0 0
      %702 = vmatpush1.bf16.msra.mxu0 0
      %703 = vmatprep.subr.bf16.mxu0 0
      %704 = vmatpush1.bf16.msra.mxu0 0
      %705 = vmatprep.subr.bf16.mxu0 0
      %706 = vmatpush1.bf16.msra.mxu0 0
      %707 = vmatprep.subr.bf16.mxu0 0
      %708 = vmatpush1.bf16.msra.mxu0 %v691
      %709 = vmatprep.subr.bf16.mxu0 0
      %710 = vmatpush2.bf16.msra.mxu0 0
      %711 = vmatprep.subr.bf16.mxu0 0
      %712 = vmatpush2.bf16.msra.mxu0 0
      %713 = vmatprep.subr.bf16.mxu0 0
      %714 = vmatpush2.bf16.msra.mxu0 0
      %715 = vmatprep.subr.bf16.mxu0 0
      %716 = vmatpush2.bf16.msra.mxu0 0
      %717 = vmatprep.subr.bf16.mxu0 0
      %718 = vmatpush2.bf16.msra.mxu0 0
      %719 = vmatprep.subr.bf16.mxu0 0
      %720 = vmatpush2.bf16.msra.mxu0 0
      %721 = vmatprep.subr.bf16.mxu0 0
      %722 = vmatpush2.bf16.msra.mxu0 0
      %723 = vmatprep.subr.bf16.mxu0 0
      %724 = vmatpush2.bf16.msra.mxu0 0
      %725 = vmatprep.mubr.bf16.mxu0 0
      %726 = vmatmul.mubr.bf16.gmra.mxu0 %v682
      %v727 = vpop.f32.mrf.mxu0
      %v728 = vadd.f32 0.0, %v727
      %v729 = vpop.f32.mrf.mxu0
      %v730 = vpop.f32.mrf.mxu0
      %v731 = vadd.f32 0.0, %v730
      %v732 = vpop.f32.mrf.mxu0
      %733 = vmatprep.mubr.bf16.mxu0 0
      %734 = vmatmul.mubr.bf16.gmra.mxu0 %v684
      %v735 = vpop.f32.mrf.mxu0
      %v736 = vadd.f32 0.0, %v735
      %v737 = vpop.f32.mrf.mxu0
      %v738 = vpop.f32.mrf.mxu0
      %v739 = vadd.f32 0.0, %v738
      %v740 = vpop.f32.mrf.mxu0
      %741 = vmatprep.mubr.bf16.mxu0 0
      %742 = vmatmul.mubr.bf16.gmra.mxu0 %v686
      %v743 = vpop.f32.mrf.mxu0
      %v744 = vadd.f32 0.0, %v743
      %v745 = vpop.f32.mrf.mxu0
      %v746 = vpop.f32.mrf.mxu0
      %v747 = vadd.f32 0.0, %v746
      %v748 = vpop.f32.mrf.mxu0
      %749 = vmatprep.mubr.bf16.mxu0 0
      %750 = vmatmul.mubr.bf16.gmra.mxu0 %v688
      %v751 = vpop.f32.mrf.mxu0
      %v752 = vadd.f32 0.0, %v751
      %v753 = vpop.f32.mrf.mxu0
      %v754 = vpop.f32.mrf.mxu0
      %v755 = vadd.f32 0.0, %v754
      %v756 = vpop.f32.mrf.mxu0
      %757 = vdwg.mxu0
      %v902 = vunpack.c.l.b16 %v536
      %v903 = vunpack.c.l.b16 %v537
      %v904 = vunpack.c.l.b16 %v538
      %v905 = vunpack.c.l.b16 %v539
      %v906 = vunpack.c.l.b16 %v540
      %v907 = vunpack.c.l.b16 %v541
      %v908 = vunpack.c.l.b16 %v542
      %v909 = vunpack.c.l.b16 %v543
      %v910 = vunpack.c.l.b16 %v544
      %v911 = vunpack.c.l.b16 %v545
      %v912 = vunpack.c.l.b16 %v546
      %v913 = vunpack.c.l.b16 %v547
      %v914 = vunpack.c.l.b16 %v548
      %v915 = vunpack.c.l.b16 %v549
      %v916 = vunpack.c.l.b16 %v550
      %v917 = vunpack.c.l.b16 %v551
      %v918 = vunpack.c.l.b16 %v552
      %v919 = vunpack.c.l.b16 %v553
      %v920 = vunpack.c.l.b16 %v554
      %v921 = vunpack.c.l.b16 %v555
      %v922 = vunpack.c.l.b16 %v556
      %v923 = vunpack.c.l.b16 %v557
      %v924 = vunpack.c.l.b16 %v558
      %v925 = vunpack.c.l.b16 %v559
      %v926 = vunpack.c.l.b16 %v560
      %v927 = vunpack.c.l.b16 %v561
      %v928 = vunpack.c.l.b16 %v562
      %v929 = vunpack.c.l.b16 %v563
      %v930 = vunpack.c.l.b16 %v564
      %v931 = vunpack.c.l.b16 %v565
      %v932 = vunpack.c.l.b16 %v566
      %v933 = vunpack.c.l.b16 %v567
      %v934 = vunpack.c.l.b16 %v568
      %v935 = vunpack.c.l.b16 %v569
      %v936 = vunpack.c.l.b16 %v570
      %v937 = vunpack.c.l.b16 %v571
      %v938 = vunpack.c.l.b16 %v572
      %v939 = vunpack.c.l.b16 %v573
      %v940 = vunpack.c.l.b16 %v574
      %v941 = vunpack.c.l.b16 %v575
      %v942 = vunpack.c.l.b16 %v576
      %v943 = vunpack.c.l.b16 %v577
      %v944 = vunpack.c.l.b16 %v578
      %v945 = vunpack.c.l.b16 %v579
      %v946 = vunpack.c.l.b16 %v580
      %v947 = vunpack.c.l.b16 %v581
      %v948 = vunpack.c.l.b16 %v582
      %v949 = vunpack.c.l.b16 %v583
      %v950 = vunpack.c.l.b16 %v584
      %v951 = vunpack.c.l.b16 %v585
      %v952 = vunpack.c.l.b16 %v586
      %v953 = vunpack.c.l.b16 %v587
      %v954 = vunpack.c.l.b16 %v588
      %v955 = vunpack.c.l.b16 %v589
      %v956 = vunpack.c.l.b16 %v590
      %v957 = vunpack.c.l.b16 %v591
      %v958 = vunpack.c.l.b16 %v592
      %v959 = vunpack.c.l.b16 %v593
      %v960 = vunpack.c.l.b16 %v594
      %v961 = vunpack.c.l.b16 %v595
      %v962 = vunpack.c.l.b16 %v596
      %v963 = vunpack.c.l.b16 %v597
      %v964 = vunpack.c.l.b16 %v598
      %v965 = vunpack.c.l.b16 %v599
      %v966 = vunpack.c.l.b16 %v600
      %v967 = vunpack.c.l.b16 %v601
      %v968 = vunpack.c.l.b16 %v602
      %v969 = vunpack.c.l.b16 %v603
      %v970 = vunpack.c.l.b16 %v604
      %v971 = vunpack.c.l.b16 %v605
      %v972 = vunpack.c.l.b16 %v606
      %v973 = vunpack.c.l.b16 %v607
      %v974 = vunpack.c.l.b16 %v608
      %v975 = vunpack.c.l.b16 %v609
      %v976 = vunpack.c.l.b16 %v610
      %v977 = vunpack.c.l.b16 %v611
      %v978 = vunpack.c.l.b16 %v612
      %v979 = vunpack.c.l.b16 %v613
      %v980 = vunpack.c.l.b16 %v614
      %v981 = vunpack.c.l.b16 %v615
      %v982 = vunpack.c.l.b16 %v616
      %v983 = vunpack.c.l.b16 %v617
      %v984 = vunpack.c.l.b16 %v618
      %v985 = vunpack.c.l.b16 %v619
      %v986 = vunpack.c.l.b16 %v620
      %v987 = vunpack.c.l.b16 %v621
      %v988 = vunpack.c.l.b16 %v622
      %v989 = vunpack.c.l.b16 %v623
      %v990 = vunpack.c.l.b16 %v624
      %v991 = vunpack.c.l.b16 %v625
      %v992 = vunpack.c.l.b16 %v626
      %v993 = vunpack.c.l.b16 %v627
      %v994 = vunpack.c.l.b16 %v628
      %v995 = vunpack.c.l.b16 %v629
      %v996 = vunpack.c.l.b16 %v630
      %v997 = vunpack.c.l.b16 %v631
      %v998 = vunpack.c.l.b16 %v632
      %v999 = vunpack.c.l.b16 %v633
      %v1000 = vunpack.c.l.b16 %v634
      %v1001 = vunpack.c.l.b16 %v635
      %v1002 = vunpack.c.l.b16 %v636
      %v1003 = vunpack.c.l.b16 %v637
      %v1004 = vunpack.c.l.b16 %v638
      %v1005 = vunpack.c.l.b16 %v639
      %v1006 = vunpack.c.l.b16 %v640
      %v1007 = vunpack.c.l.b16 %v641
      %v1008 = vunpack.c.l.b16 %v642
      %v1009 = vunpack.c.l.b16 %v643
      %v1010 = vunpack.c.l.b16 %v644
      %v1011 = vunpack.c.l.b16 %v645
      %v1012 = vunpack.c.l.b16 %v646
      %v1013 = vunpack.c.l.b16 %v647
      %v1014 = vunpack.c.l.b16 %v648
      %v1015 = vunpack.c.l.b16 %v649
      %v1016 = vunpack.c.l.b16 %v650
      %v1017 = vunpack.c.l.b16 %v651
      %v1018 = vunpack.c.l.b16 %v652
      %v1019 = vunpack.c.l.b16 %v653
      %v1020 = vunpack.c.l.b16 %v654
      %v1021 = vunpack.c.l.b16 %v655
      %v1022 = vunpack.c.l.b16 %v656
      %v1023 = vunpack.c.l.b16 %v657
      %v1024 = vunpack.c.l.b16 %v658
      %v1025 = vunpack.c.l.b16 %v659
      %v1026 = vunpack.c.l.b16 %v660
      %v1027 = vunpack.c.l.b16 %v661
      %v1028 = vunpack.c.l.b16 %v662
      %v1029 = vunpack.c.l.b16 %v663
      %v1030 = vunpack.c.l.b16 %v664
      %v1031 = vunpack.c.l.b16 %v665
      %v1032 = vunpack.c.l.b16 %v666
      %v1033 = vunpack.c.l.b16 %v667
      %v1034 = vunpack.c.l.b16 %v668
      %v1035 = vunpack.c.l.b16 %v669
      %v1036 = vunpack.c.l.b16 %v670
      %v1037 = vunpack.c.l.b16 %v671
      %v1038 = vunpack.c.l.b16 %v672
      %v1039 = vunpack.c.l.b16 %v673
      %v1040 = vunpack.c.l.b16 %v674
      %v1041 = vunpack.c.l.b16 %v675
      %v1042 = vunpack.c.l.b16 %v676
      %v1043 = vunpack.c.l.b16 %v677
      %v1044 = vunpack.c.l.b16 %v678
      %v1045 = vunpack.c.l.b16 %v679
      %v1046 = vpack.c.b16 %v903, %v902
      %v1047 = vpack.c.b16 %v905, %v904
      %v1048 = vpack.c.b16 %v907, %v906
      %v1049 = vpack.c.b16 %v909, %v908
      %v1050 = vpack.c.b16 %v911, %v910
      %v1051 = vpack.c.b16 %v913, %v912
      %v1052 = vpack.c.b16 %v915, %v914
      %v1053 = vpack.c.b16 %v917, %v916
      %v1054 = vpack.c.b16 %v919, %v918
      %v1055 = vpack.c.b16 %v921, %v920
      %v1056 = vpack.c.b16 %v923, %v922
      %v1057 = vpack.c.b16 %v925, %v924
      %v1058 = vpack.c.b16 %v927, %v926
      %v1059 = vpack.c.b16 %v929, %v928
      %v1060 = vpack.c.b16 %v931, %v930
      %v1061 = vpack.c.b16 %v933, %v932
      %v1062 = vpack.c.b16 %v935, %v934
      %v1063 = vpack.c.b16 %v937, %v936
      %v1064 = vpack.c.b16 %v939, %v938
      %v1065 = vpack.c.b16 %v941, %v940
      %v1066 = vpack.c.b16 %v943, %v942
      %v1067 = vpack.c.b16 %v945, %v944
      %v1068 = vpack.c.b16 %v947, %v946
      %v1069 = vpack.c.b16 %v949, %v948
      %v1070 = vpack.c.b16 %v951, %v950
      %v1071 = vpack.c.b16 %v953, %v952
      %v1072 = vpack.c.b16 %v955, %v954
      %v1073 = vpack.c.b16 %v957, %v956
      %v1074 = vpack.c.b16 %v959, %v958
      %v1075 = vpack.c.b16 %v961, %v960
      %v1076 = vpack.c.b16 %v963, %v962
      %v1077 = vpack.c.b16 %v965, %v964
      %v1078 = vpack.c.b16 %v967, %v966
      %v1079 = vpack.c.b16 %v969, %v968
      %v1080 = vpack.c.b16 %v971, %v970
      %v1081 = vpack.c.b16 %v973, %v972
      %v1082 = vpack.c.b16 %v975, %v974
      %v1083 = vpack.c.b16 %v977, %v976
      %v1084 = vpack.c.b16 %v979, %v978
      %v1085 = vpack.c.b16 %v981, %v980
      %v1086 = vpack.c.b16 %v983, %v982
      %v1087 = vpack.c.b16 %v985, %v984
      %v1088 = vpack.c.b16 %v987, %v986
      %v1089 = vpack.c.b16 %v989, %v988
      %v1090 = vpack.c.b16 %v991, %v990
      %v1091 = vpack.c.b16 %v993, %v992
      %v1092 = vpack.c.b16 %v995, %v994
      %v1093 = vpack.c.b16 %v997, %v996
      %v1094 = vpack.c.b16 %v999, %v998
      %v1095 = vpack.c.b16 %v1001, %v1000
      %v1096 = vpack.c.b16 %v1003, %v1002
      %v1097 = vpack.c.b16 %v1005, %v1004
      %v1098 = vpack.c.b16 %v1007, %v1006
      %v1099 = vpack.c.b16 %v1009, %v1008
      %v1100 = vpack.c.b16 %v1011, %v1010
      %v1101 = vpack.c.b16 %v1013, %v1012
      %v1102 = vpack.c.b16 %v1015, %v1014
      %v1103 = vpack.c.b16 %v1017, %v1016
      %v1104 = vpack.c.b16 %v1019, %v1018
      %v1105 = vpack.c.b16 %v1021, %v1020
      %v1106 = vpack.c.b16 %v1023, %v1022
      %v1107 = vpack.c.b16 %v1025, %v1024
      %v1108 = vpack.c.b16 %v1027, %v1026
      %v1109 = vpack.c.b16 %v1029, %v1028
      %v1110 = vpack.c.b16 %v1031, %v1030
      %v1111 = vpack.c.b16 %v1033, %v1032
      %v1112 = vpack.c.b16 %v1035, %v1034
      %v1113 = vpack.c.b16 %v1037, %v1036
      %v1114 = vpack.c.b16 %v1039, %v1038
      %v1115 = vpack.c.b16 %v1041, %v1040
      %v1116 = vpack.c.b16 %v1043, %v1042
      %v1117 = vpack.c.b16 %v1045, %v1044
      %1190 = vmatprep.subr.bf16.mxu0 0
      %1191 = vmatpush1.bf16.msra.mxu0 %v1053
      %1192 = vmatprep.subr.bf16.mxu0 0
      %1193 = vmatpush1.bf16.msra.mxu0 %v1052
      %1194 = vmatprep.subr.bf16.mxu0 0
      %1195 = vmatpush1.bf16.msra.mxu0 %v1051
      %1196 = vmatprep.subr.bf16.mxu0 0
      %1197 = vmatpush1.bf16.msra.mxu0 %v1050
      %1198 = vmatprep.subr.bf16.mxu0 0
      %1199 = vmatpush1.bf16.msra.mxu0 %v1049
      %1200 = vmatprep.subr.bf16.mxu0 0
      %1201 = vmatpush1.bf16.msra.mxu0 %v1048
      %1202 = vmatprep.subr.bf16.mxu0 0
      %1203 = vmatpush1.bf16.msra.mxu0 %v1047
      %1204 = vmatprep.subr.bf16.mxu0 0
      %1205 = vmatpush1.bf16.msra.mxu0 %v1046
      %1206 = vmatprep.subr.bf16.mxu0 0
      %1207 = vmatpush2.bf16.msra.mxu0 %v1061
      %1208 = vmatprep.subr.bf16.mxu0 0
      %1209 = vmatpush2.bf16.msra.mxu0 %v1060
      %1210 = vmatprep.subr.bf16.mxu0 0
      %1211 = vmatpush2.bf16.msra.mxu0 %v1059
      %1212 = vmatprep.subr.bf16.mxu0 0
      %1213 = vmatpush2.bf16.msra.mxu0 %v1058
      %1214 = vmatprep.subr.bf16.mxu0 0
      %1215 = vmatpush2.bf16.msra.mxu0 %v1057
      %1216 = vmatprep.subr.bf16.mxu0 0
      %1217 = vmatpush2.bf16.msra.mxu0 %v1056
      %1218 = vmatprep.subr.bf16.mxu0 0
      %1219 = vmatpush2.bf16.msra.mxu0 %v1055
      %1220 = vmatprep.subr.bf16.mxu0 0
      %1221 = vmatpush2.bf16.msra.mxu0 %v1054
      %1222 = vmatprep.mubr.bf16.mxu0 %v501
      %1223 = vmatmul.mubr.bf16.gmra.mxu0 %v500
      %v1224 = vpop.f32.mrf.mxu0
      %v1225 = vadd.f32 %v728, %v1224
      %v1226 = vpop.f32.mrf.mxu0
      %v1227 = vpop.f32.mrf.mxu0
      %v1228 = vadd.f32 %v731, %v1227
      %v1229 = vpop.f32.mrf.mxu0
      %1230 = vmatprep.mubr.bf16.mxu0 %v510
      %1231 = vmatmul.mubr.bf16.gmra.mxu0 %v509
      %v1232 = vpop.f32.mrf.mxu0
      %v1233 = vadd.f32 %v736, %v1232
      %v1234 = vpop.f32.mrf.mxu0
      %v1235 = vpop.f32.mrf.mxu0
      %v1236 = vadd.f32 %v739, %v1235
      %v1237 = vpop.f32.mrf.mxu0
      %1238 = vmatprep.mubr.bf16.mxu0 %v519
      %1239 = vmatmul.mubr.bf16.gmra.mxu0 %v518
      %v1240 = vpop.f32.mrf.mxu0
      %v1241 = vadd.f32 %v744, %v1240
      %v1242 = vpop.f32.mrf.mxu0
      %v1243 = vpop.f32.mrf.mxu0
      %v1244 = vadd.f32 %v747, %v1243
      %v1245 = vpop.f32.mrf.mxu0
      %1246 = vmatprep.mubr.bf16.mxu0 %v528
      %1247 = vmatmul.mubr.bf16.gmra.mxu0 %v527
      %v1248 = vpop.f32.mrf.mxu0
      %v1249 = vadd.f32 %v752, %v1248
      %v1250 = vpop.f32.mrf.mxu0
      %v1251 = vpop.f32.mrf.mxu0
      %v1252 = vadd.f32 %v755, %v1251
      %v1253 = vpop.f32.mrf.mxu0
      %1254 = vdwg.mxu0
      %1255 = vmatprep.subr.bf16.mxu0 0
      %1256 = vmatpush1.bf16.msra.mxu0 %v1069
      %1257 = vmatprep.subr.bf16.mxu0 0
      %1258 = vmatpush1.bf16.msra.mxu0 %v1068
      %1259 = vmatprep.subr.bf16.mxu0 0
      %1260 = vmatpush1.bf16.msra.mxu0 %v1067
      %1261 = vmatprep.subr.bf16.mxu0 0
      %1262 = vmatpush1.bf16.msra.mxu0 %v1066
      %1263 = vmatprep.subr.bf16.mxu0 0
      %1264 = vmatpush1.bf16.msra.mxu0 %v1065
      %1265 = vmatprep.subr.bf16.mxu0 0
      %1266 = vmatpush1.bf16.msra.mxu0 %v1064
      %1267 = vmatprep.subr.bf16.mxu0 0
      %1268 = vmatpush1.bf16.msra.mxu0 %v1063
      %1269 = vmatprep.subr.bf16.mxu0 0
      %1270 = vmatpush1.bf16.msra.mxu0 %v1062
      %1271 = vmatprep.subr.bf16.mxu0 0
      %1272 = vmatpush2.bf16.msra.mxu0 %v1077
      %1273 = vmatprep.subr.bf16.mxu0 0
      %1274 = vmatpush2.bf16.msra.mxu0 %v1076
      %1275 = vmatprep.subr.bf16.mxu0 0
      %1276 = vmatpush2.bf16.msra.mxu0 %v1075
      %1277 = vmatprep.subr.bf16.mxu0 0
      %1278 = vmatpush2.bf16.msra.mxu0 %v1074
      %1279 = vmatprep.subr.bf16.mxu0 0
      %1280 = vmatpush2.bf16.msra.mxu0 %v1073
      %1281 = vmatprep.subr.bf16.mxu0 0
      %1282 = vmatpush2.bf16.msra.mxu0 %v1072
      %1283 = vmatprep.subr.bf16.mxu0 0
      %1284 = vmatpush2.bf16.msra.mxu0 %v1071
      %1285 = vmatprep.subr.bf16.mxu0 0
      %1286 = vmatpush2.bf16.msra.mxu0 %v1070
      %1287 = vmatprep.mubr.bf16.mxu0 %v503
      %1288 = vmatmul.mubr.bf16.gmra.mxu0 %v502
      %v1289 = vpop.f32.mrf.mxu0
      %v1290 = vadd.f32 %v1225, %v1289
      %v1291 = vpop.f32.mrf.mxu0
      %v1292 = vpop.f32.mrf.mxu0
      %v1293 = vadd.f32 %v1228, %v1292
      %v1294 = vpop.f32.mrf.mxu0
      %1295 = vmatprep.mubr.bf16.mxu0 %v512
      %1296 = vmatmul.mubr.bf16.gmra.mxu0 %v511
      %v1297 = vpop.f32.mrf.mxu0
      %v1298 = vadd.f32 %v1233, %v1297
      %v1299 = vpop.f32.mrf.mxu0
      %v1300 = vpop.f32.mrf.mxu0
      %v1301 = vadd.f32 %v1236, %v1300
      %v1302 = vpop.f32.mrf.mxu0
      %1303 = vmatprep.mubr.bf16.mxu0 %v521
      %1304 = vmatmul.mubr.bf16.gmra.mxu0 %v520
      %v1305 = vpop.f32.mrf.mxu0
      %v1306 = vadd.f32 %v1241, %v1305
      %v1307 = vpop.f32.mrf.mxu0
      %v1308 = vpop.f32.mrf.mxu0
      %v1309 = vadd.f32 %v1244, %v1308
      %v1310 = vpop.f32.mrf.mxu0
      %1311 = vmatprep.mubr.bf16.mxu0 %v530
      %1312 = vmatmul.mubr.bf16.gmra.mxu0 %v529
      %v1313 = vpop.f32.mrf.mxu0
      %v1314 = vadd.f32 %v1249, %v1313
      %v1315 = vpop.f32.mrf.mxu0
      %v1316 = vpop.f32.mrf.mxu0
      %v1317 = vadd.f32 %v1252, %v1316
      %v1318 = vpop.f32.mrf.mxu0
      %1319 = vdwg.mxu0
      %1320 = vmatprep.subr.bf16.mxu0 0
      %1321 = vmatpush1.bf16.msra.mxu0 %v1085
      %1322 = vmatprep.subr.bf16.mxu0 0
      %1323 = vmatpush1.bf16.msra.mxu0 %v1084
      %1324 = vmatprep.subr.bf16.mxu0 0
      %1325 = vmatpush1.bf16.msra.mxu0 %v1083
      %1326 = vmatprep.subr.bf16.mxu0 0
      %1327 = vmatpush1.bf16.msra.mxu0 %v1082
      %1328 = vmatprep.subr.bf16.mxu0 0
      %1329 = vmatpush1.bf16.msra.mxu0 %v1081
      %1330 = vmatprep.subr.bf16.mxu0 0
      %1331 = vmatpush1.bf16.msra.mxu0 %v1080
      %1332 = vmatprep.subr.bf16.mxu0 0
      %1333 = vmatpush1.bf16.msra.mxu0 %v1079
      %1334 = vmatprep.subr.bf16.mxu0 0
      %1335 = vmatpush1.bf16.msra.mxu0 %v1078
      %1336 = vmatprep.subr.bf16.mxu0 0
      %1337 = vmatpush2.bf16.msra.mxu0 %v1093
      %1338 = vmatprep.subr.bf16.mxu0 0
      %1339 = vmatpush2.bf16.msra.mxu0 %v1092
      %1340 = vmatprep.subr.bf16.mxu0 0
      %1341 = vmatpush2.bf16.msra.mxu0 %v1091
      %1342 = vmatprep.subr.bf16.mxu0 0
      %1343 = vmatpush2.bf16.msra.mxu0 %v1090
      %1344 = vmatprep.subr.bf16.mxu0 0
      %1345 = vmatpush2.bf16.msra.mxu0 %v1089
      %1346 = vmatprep.subr.bf16.mxu0 0
      %1347 = vmatpush2.bf16.msra.mxu0 %v1088
      %1348 = vmatprep.subr.bf16.mxu0 0
      %1349 = vmatpush2.bf16.msra.mxu0 %v1087
      %1350 = vmatprep.subr.bf16.mxu0 0
      %1351 = vmatpush2.bf16.msra.mxu0 %v1086
      %1352 = vmatprep.mubr.bf16.mxu0 %v505
      %1353 = vmatmul.mubr.bf16.gmra.mxu0 %v504
      %v1354 = vpop.f32.mrf.mxu0
      %v1355 = vadd.f32 %v1290, %v1354
      %v1356 = vpop.f32.mrf.mxu0
      %v1357 = vpop.f32.mrf.mxu0
      %v1358 = vadd.f32 %v1293, %v1357
      %v1359 = vpop.f32.mrf.mxu0
      %1360 = vmatprep.mubr.bf16.mxu0 %v514
      %1361 = vmatmul.mubr.bf16.gmra.mxu0 %v513
      %v1362 = vpop.f32.mrf.mxu0
      %v1363 = vadd.f32 %v1298, %v1362
      %v1364 = vpop.f32.mrf.mxu0
      %v1365 = vpop.f32.mrf.mxu0
      %v1366 = vadd.f32 %v1301, %v1365
      %v1367 = vpop.f32.mrf.mxu0
      %1368 = vmatprep.mubr.bf16.mxu0 %v523
      %1369 = vmatmul.mubr.bf16.gmra.mxu0 %v522
      %v1370 = vpop.f32.mrf.mxu0
      %v1371 = vadd.f32 %v1306, %v1370
      %v1372 = vpop.f32.mrf.mxu0
      %v1373 = vpop.f32.mrf.mxu0
      %v1374 = vadd.f32 %v1309, %v1373
      %v1375 = vpop.f32.mrf.mxu0
      %1376 = vmatprep.mubr.bf16.mxu0 %v532
      %1377 = vmatmul.mubr.bf16.gmra.mxu0 %v531
      %v1378 = vpop.f32.mrf.mxu0
      %v1379 = vadd.f32 %v1314, %v1378
      %v1380 = vpop.f32.mrf.mxu0
      %v1381 = vpop.f32.mrf.mxu0
      %v1382 = vadd.f32 %v1317, %v1381
      %v1383 = vpop.f32.mrf.mxu0
      %1384 = vdwg.mxu0
      %1385 = vmatprep.subr.bf16.mxu0 0
      %1386 = vmatpush1.bf16.msra.mxu0 %v1101
      %1387 = vmatprep.subr.bf16.mxu0 0
      %1388 = vmatpush1.bf16.msra.mxu0 %v1100
      %1389 = vmatprep.subr.bf16.mxu0 0
      %1390 = vmatpush1.bf16.msra.mxu0 %v1099
      %1391 = vmatprep.subr.bf16.mxu0 0
      %1392 = vmatpush1.bf16.msra.mxu0 %v1098
      %1393 = vmatprep.subr.bf16.mxu0 0
      %1394 = vmatpush1.bf16.msra.mxu0 %v1097
      %1395 = vmatprep.subr.bf16.mxu0 0
      %1396 = vmatpush1.bf16.msra.mxu0 %v1096
      %1397 = vmatprep.subr.bf16.mxu0 0
      %1398 = vmatpush1.bf16.msra.mxu0 %v1095
      %1399 = vmatprep.subr.bf16.mxu0 0
      %1400 = vmatpush1.bf16.msra.mxu0 %v1094
      %1401 = vmatprep.subr.bf16.mxu0 0
      %1402 = vmatpush2.bf16.msra.mxu0 %v1109
      %1403 = vmatprep.subr.bf16.mxu0 0
      %1404 = vmatpush2.bf16.msra.mxu0 %v1108
      %1405 = vmatprep.subr.bf16.mxu0 0
      %1406 = vmatpush2.bf16.msra.mxu0 %v1107
      %1407 = vmatprep.subr.bf16.mxu0 0
      %1408 = vmatpush2.bf16.msra.mxu0 %v1106
      %1409 = vmatprep.subr.bf16.mxu0 0
      %1410 = vmatpush2.bf16.msra.mxu0 %v1105
      %1411 = vmatprep.subr.bf16.mxu0 0
      %1412 = vmatpush2.bf16.msra.mxu0 %v1104
      %1413 = vmatprep.subr.bf16.mxu0 0
      %1414 = vmatpush2.bf16.msra.mxu0 %v1103
      %1415 = vmatprep.subr.bf16.mxu0 0
      %1416 = vmatpush2.bf16.msra.mxu0 %v1102
      %1417 = vmatprep.mubr.bf16.mxu0 %v507
      %1418 = vmatmul.mubr.bf16.gmra.mxu0 %v506
      %v1419 = vpop.f32.mrf.mxu0
      %v1420 = vadd.f32 %v1355, %v1419
      %v1421 = vpop.f32.mrf.mxu0
      %v1422 = vpop.f32.mrf.mxu0
      %v1423 = vadd.f32 %v1358, %v1422
      %v1424 = vpop.f32.mrf.mxu0
      %1425 = vmatprep.mubr.bf16.mxu0 %v516
      %1426 = vmatmul.mubr.bf16.gmra.mxu0 %v515
      %v1427 = vpop.f32.mrf.mxu0
      %v1428 = vadd.f32 %v1363, %v1427
      %v1429 = vpop.f32.mrf.mxu0
      %v1430 = vpop.f32.mrf.mxu0
      %v1431 = vadd.f32 %v1366, %v1430
      %v1432 = vpop.f32.mrf.mxu0
      %1433 = vmatprep.mubr.bf16.mxu0 %v525
      %1434 = vmatmul.mubr.bf16.gmra.mxu0 %v524
      %v1435 = vpop.f32.mrf.mxu0
      %v1436 = vadd.f32 %v1371, %v1435
      %v1437 = vpop.f32.mrf.mxu0
      %v1438 = vpop.f32.mrf.mxu0
      %v1439 = vadd.f32 %v1374, %v1438
      %v1440 = vpop.f32.mrf.mxu0
      %1441 = vmatprep.mubr.bf16.mxu0 %v534
      %1442 = vmatmul.mubr.bf16.gmra.mxu0 %v533
      %v1443 = vpop.f32.mrf.mxu0
      %v1444 = vadd.f32 %v1379, %v1443
      %v1445 = vpop.f32.mrf.mxu0
      %v1446 = vpop.f32.mrf.mxu0
      %v1447 = vadd.f32 %v1382, %v1446
      %v1448 = vpop.f32.mrf.mxu0
      %1449 = vdwg.mxu0
      %1450 = vmatprep.subr.bf16.mxu0 0
      %1451 = vmatpush1.bf16.msra.mxu0 %v1117
      %1452 = vmatprep.subr.bf16.mxu0 0
      %1453 = vmatpush1.bf16.msra.mxu0 %v1116
      %1454 = vmatprep.subr.bf16.mxu0 0
      %1455 = vmatpush1.bf16.msra.mxu0 %v1115
      %1456 = vmatprep.subr.bf16.mxu0 0
      %1457 = vmatpush1.bf16.msra.mxu0 %v1114
      %1458 = vmatprep.subr.bf16.mxu0 0
      %1459 = vmatpush1.bf16.msra.mxu0 %v1113
      %1460 = vmatprep.subr.bf16.mxu0 0
      %1461 = vmatpush1.bf16.msra.mxu0 %v1112
      %1462 = vmatprep.subr.bf16.mxu0 0
      %1463 = vmatpush1.bf16.msra.mxu0 %v1111
      %1464 = vmatprep.subr.bf16.mxu0 0
      %1465 = vmatpush1.bf16.msra.mxu0 %v1110
      %1466 = vmatprep.subr.bf16.mxu0 0
      %1467 = vmatpush2.bf16.msra.mxu0 0
      %1468 = vmatprep.subr.bf16.mxu0 0
      %1469 = vmatpush2.bf16.msra.mxu0 0
      %1470 = vmatprep.subr.bf16.mxu0 0
      %1471 = vmatpush2.bf16.msra.mxu0 0
      %1472 = vmatprep.subr.bf16.mxu0 0
      %1473 = vmatpush2.bf16.msra.mxu0 0
      %1474 = vmatprep.subr.bf16.mxu0 0
      %1475 = vmatpush2.bf16.msra.mxu0 0
      %1476 = vmatprep.subr.bf16.mxu0 0
      %1477 = vmatpush2.bf16.msra.mxu0 0
      %1478 = vmatprep.subr.bf16.mxu0 0
      %1479 = vmatpush2.bf16.msra.mxu0 0
      %1480 = vmatprep.subr.bf16.mxu0 0
      %1481 = vmatpush2.bf16.msra.mxu0 0
      %1482 = vmatprep.mubr.bf16.mxu0 0
      %1483 = vmatmul.mubr.bf16.gmra.mxu0 %v508
      %v1484 = vpop.f32.mrf.mxu0
      %v1485 = vadd.f32 %v1420, %v1484
      %v1486 = vpop.f32.mrf.mxu0
      %v1487 = vpop.f32.mrf.mxu0
      %v1488 = vadd.f32 %v1423, %v1487
      %v1489 = vpop.f32.mrf.mxu0
      %1490 = vmatprep.mubr.bf16.mxu0 0
      %1491 = vmatmul.mubr.bf16.gmra.mxu0 %v517
      %v1492 = vpop.f32.mrf.mxu0
      %v1493 = vadd.f32 %v1428, %v1492
      %v1494 = vpop.f32.mrf.mxu0
      %v1495 = vpop.f32.mrf.mxu0
      %v1496 = vadd.f32 %v1431, %v1495
      %v1497 = vpop.f32.mrf.mxu0
      %1498 = vmatprep.mubr.bf16.mxu0 0
      %1499 = vmatmul.mubr.bf16.gmra.mxu0 %v526
      %v1500 = vpop.f32.mrf.mxu0
      %v1501 = vadd.f32 %v1436, %v1500
      %v1502 = vpop.f32.mrf.mxu0
      %v1503 = vpop.f32.mrf.mxu0
      %v1504 = vadd.f32 %v1439, %v1503
      %v1505 = vpop.f32.mrf.mxu0
      %1506 = vmatprep.mubr.bf16.mxu0 0
      %1507 = vmatmul.mubr.bf16.gmra.mxu0 %v535
      %v1508 = vpop.f32.mrf.mxu0
      %v1509 = vadd.f32 %v1444, %v1508
      %v1510 = vpop.f32.mrf.mxu0
      %v1511 = vpop.f32.mrf.mxu0
      %v1512 = vadd.f32 %v1447, %v1511
      %v1513 = vpop.f32.mrf.mxu0
      %1514 = vdwg.mxu0
      %v1515 = vld [vmem:[%s4] sm:$0x1]
      %v1517 = vlaneseq
      %v1518 = vshrl.u32 %v1517, 7
      %v1519 = vsub.s32 0, %v1518
      %v1520 = vrot.slane %v1515, %v1519
      %v1522 = vadd.f32 %v1485, %v1520
      %v1523 = vadd.f32 %v1488, %v1520
      %v1524 = vadd.f32 %v1493, %v1520
      %v1525 = vadd.f32 %v1496, %v1520
      %v1526 = vadd.f32 %v1501, %v1520
      %v1527 = vadd.f32 %v1504, %v1520
      %v1528 = vadd.f32 %v1509, %v1520
      %v1529 = vadd.f32 %v1512, %v1520
      %v1530 = vmax.f32 %v1522, 0.0
      %v1531 = vmax.f32 %v1523, 0.0
      %v1532 = vmax.f32 %v1524, 0.0
      %v1533 = vmax.f32 %v1525, 0.0
      %v1534 = vmax.f32 %v1526, 0.0
      %v1535 = vmax.f32 %v1527, 0.0
      %v1536 = vmax.f32 %v1528, 0.0
      %v1537 = vmax.f32 %v1529, 0.0
      %1538 = vst [vmem:[%s251] sm:$0xff] %v1530
      %1539 = vst [vmem:[%s251 + $0x8] sm:$0xff] %v1531
      %1540 = vst [vmem:[%s251 + $0x10] sm:$0xff] %v1532
      %1541 = vst [vmem:[%s251 + $0x18] sm:$0xff] %v1533
      %1542 = vst [vmem:[%s251 + $0x20] sm:$0xff] %v1534
      %1543 = vst [vmem:[%s251 + $0x28] sm:$0xff] %v1535
      %1544 = vst [vmem:[%s251 + $0x30] sm:$0xff] %v1536
      %1545 = vst [vmem:[%s251 + $0x38] sm:$0xff] %v1537
      %p1546 = scmp.lt.s32.totalorder %s17, 1
      %s1547 = scalar_select %p1546, %s17, 1
      %s1548 = smul.addr %s1547, 8
      %s1549 = smul.addr %s1548, 8
      %s1550 = scalar_lea.vmem %s6, %s1549
      // Predicated region
      $region45: #{_lambda_.1} parent=43 // pred_check
        %p1551 = pneg %p166
      $region46: #{_lambda_.1} parent=43 // pred_check_branch
        %1553 = sbr.rel (%p1551) target = $region48
      $region47: #{_lambda_.1} parent=43 // pred_region
        _
      $region48: #{_lambda_.1} parent=43 // pred_fallthru
        _
    $region44: #{_lambda_.1} parent=5 // pred_fallthru
      _
    %p1554 = scmp.le.s32.totalorder 2, %s12
    // Predicated region
    $region49: #{_lambda_.1} parent=5 // pred_check
      %p1555 = pneg %p1554
    $region50: #{_lambda_.1} parent=5 // pred_check_branch
      %1557 = sbr.rel (%p1555) target = $region52
    $region51: #{_lambda_.1} parent=5 // pred_region
      %s1558 = ssub.s32 %s12, 2
      // Predicated region
      $region53: #{_lambda_.1} parent=51 // pred_check
        %p1559 = pneg %p172
      $region54: #{_lambda_.1} parent=51 // pred_check_branch
        %1561 = sbr.rel (%p1559) target = $region56
      $region55: #{_lambda_.1} parent=51 // pred_region
        %p1562 = scmp.lt.s32.totalorder %s18, 1
        %s1563 = scalar_select %p1562, %s18, 1
        %s1564 = smul.addr %s1563, 8
        %s1565 = smul.addr %s1564, 8
        %s1566 = scalar_lea.vmem %s6, %s1565
      $region56: #{_lambda_.1} parent=51 // pred_fallthru
        _
    $region52: #{_lambda_.1} parent=5 // pred_fallthru
      _
  $region6: #{_lambda_.1} parent=0 // loop_footer
    %s16 = sadd.s32 1, %s12
  $region7: #{_lambda_.1} parent=0 // loop_footer_branch
    %11 = sbr.rel target = $region3
  $region8: #{_lambda_.1} parent=0 // loop_exit
    _

</llo_original>
